<compile_context>
chip_gen: v6e
topology: v6e:2x2x1
jax: 0.10.0
libtpu: 0.0.40
codegen_flags: <defaults>
</compile_context>

<pallas_src>
import functools

import jax
import jax.numpy as jnp
from jax import lax
from jax.experimental import pallas as pl
from jax.experimental.pallas import tpu as pltpu

KSIZE = 7
PAD = KSIZE // 2  # 3


def spatial_attention_kernel(params_ref, colidx_ref, x_ref, o_ref,
                             apad_ref, mpad_ref, *, H, W):
    """One block of Bblk batch elements per grid step.

    params_ref : SMEM (2*7*7 + 1,) f32 -- conv weights (OIHW, flat) then bias
    colidx_ref : VMEM (1, H*W) int32   -- flat_index % W (column index per pixel)
    x_ref      : VMEM (Bblk, C, H*W)   -- input slab, lane-dense
    o_ref      : VMEM (Bblk, C, H*W)
    apad_ref   : VMEM scratch (Bblk, H*W + 2*(PAD*W + PAD)) f32  (avg map)
    mpad_ref   : VMEM scratch (Bblk, H*W + 2*(PAD*W + PAD)) f32  (max map)
                 Flat row-padded layout per batch row:
                 [ zero strip | row 0 ... row H-1 | zero strip ],
                 strip length = PAD*W + PAD (physical vertical padding).
    """
    Bblk, C, HW = x_ref.shape
    off0 = PAD * W + PAD           # start of the interior (pixel 0) in the scratch
    L = apad_ref.shape[1]
    WIDE = HW + 2 * PAD

    # ---- fused channel pooling: one slab read, f32 accumulation ----
    xb = x_ref[...].astype(jnp.float32)                        # (Bblk, C, HW)
    avg = jnp.sum(xb, axis=1) * (1.0 / C)                      # (Bblk, HW)
    mx = jnp.max(xb, axis=1)                                   # (Bblk, HW)

    # ---- write pooled maps into the flat row-padded scratches ----
    # The zero strips are rewritten every step (not only at program_id == 0):
    # under megacore sharding each core has its own scratch and may never run
    # step 0.  The strips are tiny (2 * Bblk * (PAD*W + PAD) floats).
    zstrip = jnp.zeros((Bblk, off0), jnp.float32)
    for ref, pooled in ((apad_ref, avg), (mpad_ref, mx)):
        ref[:, 0:off0] = zstrip
        ref[:, L - off0:L] = zstrip
        ref[:, off0:off0 + HW] = pooled

    # ---- horizontal validity masks (vertical handled by the zero strips) ----
    col = colidx_ref[0:1, :]                                   # (1, HW) int32
    col_ok = {}
    for j in range(KSIZE):
        if j == PAD:
            continue                                           # dx == 0: always valid
        d = j - PAD
        col_ok[j] = jnp.logical_and(col + d >= 0, col + d < W)

    # ---- 7x7 x 2-channel conv ----
    # 14 VMEM row-window reads, 98 in-register lane-shift taps, and only 6
    # selects: the wrap mask depends only on the horizontal offset j, so taps
    # are accumulated into per-j partial sums and masked once per j.
    parts = [None] * KSIZE
    for c, ref in enumerate((apad_ref, mpad_ref)):
        for i in range(KSIZE):
            # One VMEM read per (channel, row offset) covers all 7 lane shifts.
            wide = ref[:, i * W:i * W + WIDE]                  # (Bblk, HW + 6)
            for j in range(KSIZE):
                w = params_ref[c * KSIZE * KSIZE + i * KSIZE + j]
                t = wide[:, j:j + HW] * w                      # lane shift + scale
                parts[j] = t if parts[j] is None else parts[j] + t

    bias = params_ref[2 * KSIZE * KSIZE]
    acc = jnp.full((Bblk, HW), bias, dtype=jnp.float32)
    for j in range(KSIZE):
        pj = parts[j]
        if j != PAD:
            pj = jnp.where(col_ok[j], pj, 0.0)                 # 6 selects total
        acc = acc + pj

    att = jax.nn.sigmoid(acc)                                  # (Bblk, HW), EUP

    # ---- lane-dense broadcast multiply + store ----
    o_ref[...] = (xb * att[:, None, :]).astype(o_ref.dtype)


def spatial_attention(x, weight, bias):
    """x: (B, C, H, W); weight: (1, 2, 7, 7) f32; bias: (1,) f32."""
    B, C, H, W = x.shape
    HW = H * W

    params = jnp.concatenate(
        [weight.reshape(-1), bias.reshape(-1)]).astype(jnp.float32)   # (99,)
    col_idx = (jnp.arange(HW, dtype=jnp.int32) % W).reshape(1, HW)

    # (B, C, H, W) -> (B, C, H*W) is free: NCHW is contiguous over (H, W).
    x_flat = x.reshape(B, C, HW)

    # Largest batch block <= 8 that divides B (fills the 8 sublanes of every
    # pooled-map / conv / attention vreg when possible).
    Bblk = next(b for b in (8, 4, 2, 1) if B % b == 0)

    off0 = PAD * W + PAD
    scratch_len = HW + 2 * off0
    elt = x.dtype.itemsize
    # Explicit VMEM budget: in/out blocks (double-buffered) + col idx + scratch
    # + slack for compiler temporaries.
    vmem_bytes = (4 * Bblk * C * HW * elt + 4 * HW * 4
                  + 2 * Bblk * scratch_len * 4 + (2 << 20))
    vmem_limit = int(min(max(vmem_bytes, 4 << 20), 64 << 20))
    # NOTE: for very large C*H*W slabs (several MiB, esp. on v7x's 64 MiB VMEM)
    # add an H-tiled grid axis with a 3-row halo instead of one slab per step.

    kernel = functools.partial(spatial_attention_kernel, H=H, W=W)

    out_flat = pl.pallas_call(
        kernel,
        out_shape=jax.ShapeDtypeStruct((B, C, HW), x.dtype),
        grid_spec=pltpu.PrefetchScalarGridSpec(
            num_scalar_prefetch=0,
            grid=(B // Bblk,),
            in_specs=[
                pl.BlockSpec(memory_space=pltpu.MemorySpace.SMEM),     # conv params
                pl.BlockSpec((1, HW), lambda b: (0, 0)),               # column indices
                pl.BlockSpec((Bblk, C, HW), lambda b: (b, 0, 0)),      # x slab
            ],
            out_specs=pl.BlockSpec((Bblk, C, HW), lambda b: (b, 0, 0)),
            scratch_shapes=[
                pltpu.VMEM((Bblk, scratch_len), jnp.float32),          # avg map
                pltpu.VMEM((Bblk, scratch_len), jnp.float32),          # max map
            ],
        ),
        compiler_params=pltpu.CompilerParams(
            dimension_semantics=("parallel",),
            vmem_limit_bytes=vmem_limit,
        ),
    )(params, col_idx, x_flat)

    return out_flat.reshape(B, C, H, W)


def spatial_attention_ref(x, weight, bias):
    """Pure-JAX reference (mirrors the PyTorch forward)."""
    avg = jnp.mean(x, axis=1, keepdims=True)
    mx = jnp.max(x, axis=1, keepdims=True)
    pool = jnp.concatenate([avg, mx], axis=1)                  # (B, 2, H, W)
    conv = lax.conv_general_dilated(
        pool, weight, window_strides=(1, 1),
        padding=((PAD, PAD), (PAD, PAD)),
        dimension_numbers=("NCHW", "OIHW", "NCHW"),
    ) + bias.reshape(1, -1, 1, 1)
    return x * jax.nn.sigmoid(conv)


if __name__ == "__main__":
    def run_case(key, B, C, H, W):
        kx, kw, kb = jax.random.split(key, 3)
        x = jax.random.normal(kx, (B, C, H, W), dtype=jnp.float32)
        # Deterministic synthetic parameters (Conv2d(2, 1, 7, padding=3) shapes).
        fan_in = 2 * KSIZE * KSIZE
        bound = 1.0 / float(fan_in) ** 0.5
        weight = jax.random.uniform(
            kw, (1, 2, KSIZE, KSIZE), jnp.float32, -bound, bound)
        bias = jax.random.uniform(kb, (1,), jnp.float32, -bound, bound)

        out = jax.block_until_ready(spatial_attention(x, weight, bias))
        ref = spatial_attention_ref(x, weight, bias)
        assert out.shape == (B, C, H, W)
        err = float(jnp.max(jnp.abs(out - ref)))
        assert jnp.allclose(out, ref, atol=1e-5, rtol=1e-5), err

    key = jax.random.PRNGKey(0)
    k1, k2 = jax.random.split(key)
    run_case(k1, 2, 4, 16, 16)    # Bblk = 2 (batch block = full batch)
    run_case(k2, 8, 3, 12, 20)    # Bblk = 8, non-square spatial, odd C
    print("KERNEL_OK")
</pallas_src>

<mosaic_0001>
module attributes {stable_mosaic.version = 11 : i64} {
  func.func @spatial_attention_kernel(%arg0: i32, %arg1: memref<99xf32, #tpu.memory_space<smem>>, %arg2: memref<1x256xi32, #tpu.memory_space<vmem>>, %arg3: memref<2x4x256xf32, #tpu.memory_space<vmem>>, %arg4: memref<2x4x256xf32, #tpu.memory_space<vmem>>, %arg5: memref<2x358xf32, #tpu.memory_space<vmem>>, %arg6: memref<2x358xf32, #tpu.memory_space<vmem>>) attributes {dimension_semantics = [#tpu.dimension_semantics<parallel>], iteration_bounds = array<i64: 1>, scalar_prefetch = 0 : i64, scratch_operands = 2 : i64, tpu.core_type = #tpu.core_type<tc>, window_params = [{transform_indices = @transform_0, window_bounds = array<i64: 99>}, {pipeline_mode = #tpu.pipeline_mode<synchronous>, transform_indices = @transform_1, window_bounds = array<i64: 1, 256>}, {transform_indices = @transform_2, window_bounds = array<i64: 2, 4, 256>}, {transform_indices = @transform_3, window_bounds = array<i64: 2, 4, 256>}]} {
    %c0 = arith.constant 0 : index
    %c0_0 = arith.constant 0 : index
    %c0_1 = arith.constant 0 : index
    %0 = vector.load %arg3[%c0, %c0_0, %c0_1] : memref<2x4x256xf32, #tpu.memory_space<vmem>>, vector<2x4x256xf32>
    %cst = arith.constant dense<0.000000e+00> : vector<2x256xf32>
    %1 = vector.multi_reduction <add>, %0, %cst [1] : vector<2x4x256xf32> to vector<2x256xf32>
    %cst_2 = arith.constant 2.500000e-01 : f32
    %2 = vector.broadcast %cst_2 : f32 to vector<2x256xf32>
    %3 = arith.mulf %1, %2 : vector<2x256xf32>
    %cst_3 = arith.constant dense<0xFF800000> : vector<2x256xf32>
    %4 = vector.multi_reduction <maximumf>, %0, %cst_3 [1] : vector<2x4x256xf32> to vector<2x256xf32>
    %cst_4 = arith.constant 0.000000e+00 : f32
    %5 = vector.broadcast %cst_4 : f32 to vector<2x51xf32>
    %c0_5 = arith.constant 0 : index
    %c0_6 = arith.constant 0 : index
    %6 = vector.load %arg5[%c0_5, %c0_6] : memref<2x358xf32, #tpu.memory_space<vmem>>, vector<2x51xf32>
    tpu.vector_store %arg5[%c0_5, %c0_6], %5 {strides = array<i32>} : memref<2x358xf32, #tpu.memory_space<vmem>>, vector<2x51xf32>,
    %c0_7 = arith.constant 0 : index
    %c307 = arith.constant 307 : index
    %7 = vector.load %arg5[%c0_7, %c307] : memref<2x358xf32, #tpu.memory_space<vmem>>, vector<2x51xf32>
    tpu.vector_store %arg5[%c0_7, %c307], %5 {strides = array<i32>} : memref<2x358xf32, #tpu.memory_space<vmem>>, vector<2x51xf32>,
    %c0_8 = arith.constant 0 : index
    %c51 = arith.constant 51 : index
    %8 = vector.load %arg5[%c0_8, %c51] : memref<2x358xf32, #tpu.memory_space<vmem>>, vector<2x256xf32>
    tpu.vector_store %arg5[%c0_8, %c51], %3 {strides = array<i32>} : memref<2x358xf32, #tpu.memory_space<vmem>>, vector<2x256xf32>,
    %c0_9 = arith.constant 0 : index
    %c0_10 = arith.constant 0 : index
    %9 = vector.load %arg6[%c0_9, %c0_10] : memref<2x358xf32, #tpu.memory_space<vmem>>, vector<2x51xf32>
    tpu.vector_store %arg6[%c0_9, %c0_10], %5 {strides = array<i32>} : memref<2x358xf32, #tpu.memory_space<vmem>>, vector<2x51xf32>,
    %c0_11 = arith.constant 0 : index
    %c307_12 = arith.constant 307 : index
    %10 = vector.load %arg6[%c0_11, %c307_12] : memref<2x358xf32, #tpu.memory_space<vmem>>, vector<2x51xf32>
    tpu.vector_store %arg6[%c0_11, %c307_12], %5 {strides = array<i32>} : memref<2x358xf32, #tpu.memory_space<vmem>>, vector<2x51xf32>,
    %c0_13 = arith.constant 0 : index
    %c51_14 = arith.constant 51 : index
    %11 = vector.load %arg6[%c0_13, %c51_14] : memref<2x358xf32, #tpu.memory_space<vmem>>, vector<2x256xf32>
    tpu.vector_store %arg6[%c0_13, %c51_14], %4 {strides = array<i32>} : memref<2x358xf32, #tpu.memory_space<vmem>>, vector<2x256xf32>,
    %c0_15 = arith.constant 0 : index
    %c0_16 = arith.constant 0 : index
    %12 = vector.load %arg2[%c0_15, %c0_16] : memref<1x256xi32, #tpu.memory_space<vmem>>, vector<1x256xi32>
    %c-3_i32 = arith.constant -3 : i32
    %13 = vector.broadcast %c-3_i32 : i32 to vector<1x256xi32>
    %14 = arith.addi %12, %13 : vector<1x256xi32>
    %c0_i32 = arith.constant 0 : i32
    %15 = vector.broadcast %c0_i32 : i32 to vector<1x256xi32>
    %16 = arith.cmpi sge, %14, %15 : vector<1x256xi32>
    %c-3_i32_17 = arith.constant -3 : i32
    %17 = vector.broadcast %c-3_i32_17 : i32 to vector<1x256xi32>
    %18 = arith.addi %12, %17 : vector<1x256xi32>
    %c16_i32 = arith.constant 16 : i32
    %19 = vector.broadcast %c16_i32 : i32 to vector<1x256xi32>
    %20 = arith.cmpi slt, %18, %19 : vector<1x256xi32>
    %21 = arith.andi %16, %20 : vector<1x256xi1>
    %c-2_i32 = arith.constant -2 : i32
    %22 = vector.broadcast %c-2_i32 : i32 to vector<1x256xi32>
    %23 = arith.addi %12, %22 : vector<1x256xi32>
    %c0_i32_18 = arith.constant 0 : i32
    %24 = vector.broadcast %c0_i32_18 : i32 to vector<1x256xi32>
    %25 = arith.cmpi sge, %23, %24 : vector<1x256xi32>
    %c-2_i32_19 = arith.constant -2 : i32
    %26 = vector.broadcast %c-2_i32_19 : i32 to vector<1x256xi32>
    %27 = arith.addi %12, %26 : vector<1x256xi32>
    %c16_i32_20 = arith.constant 16 : i32
    %28 = vector.broadcast %c16_i32_20 : i32 to vector<1x256xi32>
    %29 = arith.cmpi slt, %27, %28 : vector<1x256xi32>
    %30 = arith.andi %25, %29 : vector<1x256xi1>
    %c-1_i32 = arith.constant -1 : i32
    %31 = vector.broadcast %c-1_i32 : i32 to vector<1x256xi32>
    %32 = arith.addi %12, %31 : vector<1x256xi32>
    %c0_i32_21 = arith.constant 0 : i32
    %33 = vector.broadcast %c0_i32_21 : i32 to vector<1x256xi32>
    %34 = arith.cmpi sge, %32, %33 : vector<1x256xi32>
    %c-1_i32_22 = arith.constant -1 : i32
    %35 = vector.broadcast %c-1_i32_22 : i32 to vector<1x256xi32>
    %36 = arith.addi %12, %35 : vector<1x256xi32>
    %c16_i32_23 = arith.constant 16 : i32
    %37 = vector.broadcast %c16_i32_23 : i32 to vector<1x256xi32>
    %38 = arith.cmpi slt, %36, %37 : vector<1x256xi32>
    %39 = arith.andi %34, %38 : vector<1x256xi1>
    %c1_i32 = arith.constant 1 : i32
    %40 = vector.broadcast %c1_i32 : i32 to vector<1x256xi32>
    %41 = arith.addi %12, %40 : vector<1x256xi32>
    %c0_i32_24 = arith.constant 0 : i32
    %42 = vector.broadcast %c0_i32_24 : i32 to vector<1x256xi32>
    %43 = arith.cmpi sge, %41, %42 : vector<1x256xi32>
    %c1_i32_25 = arith.constant 1 : i32
    %44 = vector.broadcast %c1_i32_25 : i32 to vector<1x256xi32>
    %45 = arith.addi %12, %44 : vector<1x256xi32>
    %c16_i32_26 = arith.constant 16 : i32
    %46 = vector.broadcast %c16_i32_26 : i32 to vector<1x256xi32>
    %47 = arith.cmpi slt, %45, %46 : vector<1x256xi32>
    %48 = arith.andi %43, %47 : vector<1x256xi1>
    %c2_i32 = arith.constant 2 : i32
    %49 = vector.broadcast %c2_i32 : i32 to vector<1x256xi32>
    %50 = arith.addi %12, %49 : vector<1x256xi32>
    %c0_i32_27 = arith.constant 0 : i32
    %51 = vector.broadcast %c0_i32_27 : i32 to vector<1x256xi32>
    %52 = arith.cmpi sge, %50, %51 : vector<1x256xi32>
    %c2_i32_28 = arith.constant 2 : i32
    %53 = vector.broadcast %c2_i32_28 : i32 to vector<1x256xi32>
    %54 = arith.addi %12, %53 : vector<1x256xi32>
    %c16_i32_29 = arith.constant 16 : i32
    %55 = vector.broadcast %c16_i32_29 : i32 to vector<1x256xi32>
    %56 = arith.cmpi slt, %54, %55 : vector<1x256xi32>
    %57 = arith.andi %52, %56 : vector<1x256xi1>
    %c3_i32 = arith.constant 3 : i32
    %58 = vector.broadcast %c3_i32 : i32 to vector<1x256xi32>
    %59 = arith.addi %12, %58 : vector<1x256xi32>
    %c0_i32_30 = arith.constant 0 : i32
    %60 = vector.broadcast %c0_i32_30 : i32 to vector<1x256xi32>
    %61 = arith.cmpi sge, %59, %60 : vector<1x256xi32>
    %c3_i32_31 = arith.constant 3 : i32
    %62 = vector.broadcast %c3_i32_31 : i32 to vector<1x256xi32>
    %63 = arith.addi %12, %62 : vector<1x256xi32>
    %c16_i32_32 = arith.constant 16 : i32
    %64 = vector.broadcast %c16_i32_32 : i32 to vector<1x256xi32>
    %65 = arith.cmpi slt, %63, %64 : vector<1x256xi32>
    %66 = arith.andi %61, %65 : vector<1x256xi1>
    %c0_33 = arith.constant 0 : index
    %c0_34 = arith.constant 0 : index
    %67 = vector.load %arg5[%c0_33, %c0_34] : memref<2x358xf32, #tpu.memory_space<vmem>>, vector<2x262xf32>
    %c0_35 = arith.constant 0 : index
    %68 = memref.load %arg1[%c0_35] : memref<99xf32, #tpu.memory_space<smem>>
    %69 = vector.extract_strided_slice %67 {offsets = [0, 0], sizes = [2, 256], strides = [1, 1]} : vector<2x262xf32> to vector<2x256xf32>
    %70 = vector.broadcast %68 : f32 to vector<2x256xf32>
    %71 = arith.mulf %69, %70 : vector<2x256xf32>
    %c1 = arith.constant 1 : index
    %72 = memref.load %arg1[%c1] : memref<99xf32, #tpu.memory_space<smem>>
    %73 = vector.extract_strided_slice %67 {offsets = [0, 1], sizes = [2, 256], strides = [1, 1]} : vector<2x262xf32> to vector<2x256xf32>
    %74 = vector.broadcast %72 : f32 to vector<2x256xf32>
    %75 = arith.mulf %73, %74 : vector<2x256xf32>
    %c2 = arith.constant 2 : index
    %76 = memref.load %arg1[%c2] : memref<99xf32, #tpu.memory_space<smem>>
    %77 = vector.extract_strided_slice %67 {offsets = [0, 2], sizes = [2, 256], strides = [1, 1]} : vector<2x262xf32> to vector<2x256xf32>
    %78 = vector.broadcast %76 : f32 to vector<2x256xf32>
    %79 = arith.mulf %77, %78 : vector<2x256xf32>
    %c3 = arith.constant 3 : index
    %80 = memref.load %arg1[%c3] : memref<99xf32, #tpu.memory_space<smem>>
    %81 = vector.extract_strided_slice %67 {offsets = [0, 3], sizes = [2, 256], strides = [1, 1]} : vector<2x262xf32> to vector<2x256xf32>
    %82 = vector.broadcast %80 : f32 to vector<2x256xf32>
    %83 = arith.mulf %81, %82 : vector<2x256xf32>
    %c4 = arith.constant 4 : index
    %84 = memref.load %arg1[%c4] : memref<99xf32, #tpu.memory_space<smem>>
    %85 = vector.extract_strided_slice %67 {offsets = [0, 4], sizes = [2, 256], strides = [1, 1]} : vector<2x262xf32> to vector<2x256xf32>
    %86 = vector.broadcast %84 : f32 to vector<2x256xf32>
    %87 = arith.mulf %85, %86 : vector<2x256xf32>
    %c5 = arith.constant 5 : index
    %88 = memref.load %arg1[%c5] : memref<99xf32, #tpu.memory_space<smem>>
    %89 = vector.extract_strided_slice %67 {offsets = [0, 5], sizes = [2, 256], strides = [1, 1]} : vector<2x262xf32> to vector<2x256xf32>
    %90 = vector.broadcast %88 : f32 to vector<2x256xf32>
    %91 = arith.mulf %89, %90 : vector<2x256xf32>
    %c6 = arith.constant 6 : index
    %92 = memref.load %arg1[%c6] : memref<99xf32, #tpu.memory_space<smem>>
    %93 = vector.extract_strided_slice %67 {offsets = [0, 6], sizes = [2, 256], strides = [1, 1]} : vector<2x262xf32> to vector<2x256xf32>
    %94 = vector.broadcast %92 : f32 to vector<2x256xf32>
    %95 = arith.mulf %93, %94 : vector<2x256xf32>
    %c0_36 = arith.constant 0 : index
    %c16 = arith.constant 16 : index
    %96 = vector.load %arg5[%c0_36, %c16] : memref<2x358xf32, #tpu.memory_space<vmem>>, vector<2x262xf32>
    %c7 = arith.constant 7 : index
    %97 = memref.load %arg1[%c7] : memref<99xf32, #tpu.memory_space<smem>>
    %98 = vector.extract_strided_slice %96 {offsets = [0, 0], sizes = [2, 256], strides = [1, 1]} : vector<2x262xf32> to vector<2x256xf32>
    %99 = vector.broadcast %97 : f32 to vector<2x256xf32>
    %100 = arith.mulf %98, %99 : vector<2x256xf32>
    %101 = arith.addf %71, %100 : vector<2x256xf32>
    %c8 = arith.constant 8 : index
    %102 = memref.load %arg1[%c8] : memref<99xf32, #tpu.memory_space<smem>>
    %103 = vector.extract_strided_slice %96 {offsets = [0, 1], sizes = [2, 256], strides = [1, 1]} : vector<2x262xf32> to vector<2x256xf32>
    %104 = vector.broadcast %102 : f32 to vector<2x256xf32>
    %105 = arith.mulf %103, %104 : vector<2x256xf32>
    %106 = arith.addf %75, %105 : vector<2x256xf32>
    %c9 = arith.constant 9 : index
    %107 = memref.load %arg1[%c9] : memref<99xf32, #tpu.memory_space<smem>>
    %108 = vector.extract_strided_slice %96 {offsets = [0, 2], sizes = [2, 256], strides = [1, 1]} : vector<2x262xf32> to vector<2x256xf32>
    %109 = vector.broadcast %107 : f32 to vector<2x256xf32>
    %110 = arith.mulf %108, %109 : vector<2x256xf32>
    %111 = arith.addf %79, %110 : vector<2x256xf32>
    %c10 = arith.constant 10 : index
    %112 = memref.load %arg1[%c10] : memref<99xf32, #tpu.memory_space<smem>>
    %113 = vector.extract_strided_slice %96 {offsets = [0, 3], sizes = [2, 256], strides = [1, 1]} : vector<2x262xf32> to vector<2x256xf32>
    %114 = vector.broadcast %112 : f32 to vector<2x256xf32>
    %115 = arith.mulf %113, %114 : vector<2x256xf32>
    %116 = arith.addf %83, %115 : vector<2x256xf32>
    %c11 = arith.constant 11 : index
    %117 = memref.load %arg1[%c11] : memref<99xf32, #tpu.memory_space<smem>>
    %118 = vector.extract_strided_slice %96 {offsets = [0, 4], sizes = [2, 256], strides = [1, 1]} : vector<2x262xf32> to vector<2x256xf32>
    %119 = vector.broadcast %117 : f32 to vector<2x256xf32>
    %120 = arith.mulf %118, %119 : vector<2x256xf32>
    %121 = arith.addf %87, %120 : vector<2x256xf32>
    %c12 = arith.constant 12 : index
    %122 = memref.load %arg1[%c12] : memref<99xf32, #tpu.memory_space<smem>>
    %123 = vector.extract_strided_slice %96 {offsets = [0, 5], sizes = [2, 256], strides = [1, 1]} : vector<2x262xf32> to vector<2x256xf32>
    %124 = vector.broadcast %122 : f32 to vector<2x256xf32>
    %125 = arith.mulf %123, %124 : vector<2x256xf32>
    %126 = arith.addf %91, %125 : vector<2x256xf32>
    %c13 = arith.constant 13 : index
    %127 = memref.load %arg1[%c13] : memref<99xf32, #tpu.memory_space<smem>>
    %128 = vector.extract_strided_slice %96 {offsets = [0, 6], sizes = [2, 256], strides = [1, 1]} : vector<2x262xf32> to vector<2x256xf32>
    %129 = vector.broadcast %127 : f32 to vector<2x256xf32>
    %130 = arith.mulf %128, %129 : vector<2x256xf32>
    %131 = arith.addf %95, %130 : vector<2x256xf32>
    %c0_37 = arith.constant 0 : index
    %c32 = arith.constant 32 : index
    %132 = vector.load %arg5[%c0_37, %c32] : memref<2x358xf32, #tpu.memory_space<vmem>>, vector<2x262xf32>
    %c14 = arith.constant 14 : index
    %133 = memref.load %arg1[%c14] : memref<99xf32, #tpu.memory_space<smem>>
    %134 = vector.extract_strided_slice %132 {offsets = [0, 0], sizes = [2, 256], strides = [1, 1]} : vector<2x262xf32> to vector<2x256xf32>
    %135 = vector.broadcast %133 : f32 to vector<2x256xf32>
    %136 = arith.mulf %134, %135 : vector<2x256xf32>
    %137 = arith.addf %101, %136 : vector<2x256xf32>
    %c15 = arith.constant 15 : index
    %138 = memref.load %arg1[%c15] : memref<99xf32, #tpu.memory_space<smem>>
    %139 = vector.extract_strided_slice %132 {offsets = [0, 1], sizes = [2, 256], strides = [1, 1]} : vector<2x262xf32> to vector<2x256xf32>
    %140 = vector.broadcast %138 : f32 to vector<2x256xf32>
    %141 = arith.mulf %139, %140 : vector<2x256xf32>
    %142 = arith.addf %106, %141 : vector<2x256xf32>
    %c16_38 = arith.constant 16 : index
    %143 = memref.load %arg1[%c16_38] : memref<99xf32, #tpu.memory_space<smem>>
    %144 = vector.extract_strided_slice %132 {offsets = [0, 2], sizes = [2, 256], strides = [1, 1]} : vector<2x262xf32> to vector<2x256xf32>
    %145 = vector.broadcast %143 : f32 to vector<2x256xf32>
    %146 = arith.mulf %144, %145 : vector<2x256xf32>
    %147 = arith.addf %111, %146 : vector<2x256xf32>
    %c17 = arith.constant 17 : index
    %148 = memref.load %arg1[%c17] : memref<99xf32, #tpu.memory_space<smem>>
    %149 = vector.extract_strided_slice %132 {offsets = [0, 3], sizes = [2, 256], strides = [1, 1]} : vector<2x262xf32> to vector<2x256xf32>
    %150 = vector.broadcast %148 : f32 to vector<2x256xf32>
    %151 = arith.mulf %149, %150 : vector<2x256xf32>
    %152 = arith.addf %116, %151 : vector<2x256xf32>
    %c18 = arith.constant 18 : index
    %153 = memref.load %arg1[%c18] : memref<99xf32, #tpu.memory_space<smem>>
    %154 = vector.extract_strided_slice %132 {offsets = [0, 4], sizes = [2, 256], strides = [1, 1]} : vector<2x262xf32> to vector<2x256xf32>
    %155 = vector.broadcast %153 : f32 to vector<2x256xf32>
    %156 = arith.mulf %154, %155 : vector<2x256xf32>
    %157 = arith.addf %121, %156 : vector<2x256xf32>
    %c19 = arith.constant 19 : index
    %158 = memref.load %arg1[%c19] : memref<99xf32, #tpu.memory_space<smem>>
    %159 = vector.extract_strided_slice %132 {offsets = [0, 5], sizes = [2, 256], strides = [1, 1]} : vector<2x262xf32> to vector<2x256xf32>
    %160 = vector.broadcast %158 : f32 to vector<2x256xf32>
    %161 = arith.mulf %159, %160 : vector<2x256xf32>
    %162 = arith.addf %126, %161 : vector<2x256xf32>
    %c20 = arith.constant 20 : index
    %163 = memref.load %arg1[%c20] : memref<99xf32, #tpu.memory_space<smem>>
    %164 = vector.extract_strided_slice %132 {offsets = [0, 6], sizes = [2, 256], strides = [1, 1]} : vector<2x262xf32> to vector<2x256xf32>
    %165 = vector.broadcast %163 : f32 to vector<2x256xf32>
    %166 = arith.mulf %164, %165 : vector<2x256xf32>
    %167 = arith.addf %131, %166 : vector<2x256xf32>
    %c0_39 = arith.constant 0 : index
    %c48 = arith.constant 48 : index
    %168 = vector.load %arg5[%c0_39, %c48] : memref<2x358xf32, #tpu.memory_space<vmem>>, vector<2x262xf32>
    %c21 = arith.constant 21 : index
    %169 = memref.load %arg1[%c21] : memref<99xf32, #tpu.memory_space<smem>>
    %170 = vector.extract_strided_slice %168 {offsets = [0, 0], sizes = [2, 256], strides = [1, 1]} : vector<2x262xf32> to vector<2x256xf32>
    %171 = vector.broadcast %169 : f32 to vector<2x256xf32>
    %172 = arith.mulf %170, %171 : vector<2x256xf32>
    %173 = arith.addf %137, %172 : vector<2x256xf32>
    %c22 = arith.constant 22 : index
    %174 = memref.load %arg1[%c22] : memref<99xf32, #tpu.memory_space<smem>>
    %175 = vector.extract_strided_slice %168 {offsets = [0, 1], sizes = [2, 256], strides = [1, 1]} : vector<2x262xf32> to vector<2x256xf32>
    %176 = vector.broadcast %174 : f32 to vector<2x256xf32>
    %177 = arith.mulf %175, %176 : vector<2x256xf32>
    %178 = arith.addf %142, %177 : vector<2x256xf32>
    %c23 = arith.constant 23 : index
    %179 = memref.load %arg1[%c23] : memref<99xf32, #tpu.memory_space<smem>>
    %180 = vector.extract_strided_slice %168 {offsets = [0, 2], sizes = [2, 256], strides = [1, 1]} : vector<2x262xf32> to vector<2x256xf32>
    %181 = vector.broadcast %179 : f32 to vector<2x256xf32>
    %182 = arith.mulf %180, %181 : vector<2x256xf32>
    %183 = arith.addf %147, %182 : vector<2x256xf32>
    %c24 = arith.constant 24 : index
    %184 = memref.load %arg1[%c24] : memref<99xf32, #tpu.memory_space<smem>>
    %185 = vector.extract_strided_slice %168 {offsets = [0, 3], sizes = [2, 256], strides = [1, 1]} : vector<2x262xf32> to vector<2x256xf32>
    %186 = vector.broadcast %184 : f32 to vector<2x256xf32>
    %187 = arith.mulf %185, %186 : vector<2x256xf32>
    %188 = arith.addf %152, %187 : vector<2x256xf32>
    %c25 = arith.constant 25 : index
    %189 = memref.load %arg1[%c25] : memref<99xf32, #tpu.memory_space<smem>>
    %190 = vector.extract_strided_slice %168 {offsets = [0, 4], sizes = [2, 256], strides = [1, 1]} : vector<2x262xf32> to vector<2x256xf32>
    %191 = vector.broadcast %189 : f32 to vector<2x256xf32>
    %192 = arith.mulf %190, %191 : vector<2x256xf32>
    %193 = arith.addf %157, %192 : vector<2x256xf32>
    %c26 = arith.constant 26 : index
    %194 = memref.load %arg1[%c26] : memref<99xf32, #tpu.memory_space<smem>>
    %195 = vector.extract_strided_slice %168 {offsets = [0, 5], sizes = [2, 256], strides = [1, 1]} : vector<2x262xf32> to vector<2x256xf32>
    %196 = vector.broadcast %194 : f32 to vector<2x256xf32>
    %197 = arith.mulf %195, %196 : vector<2x256xf32>
    %198 = arith.addf %162, %197 : vector<2x256xf32>
    %c27 = arith.constant 27 : index
    %199 = memref.load %arg1[%c27] : memref<99xf32, #tpu.memory_space<smem>>
    %200 = vector.extract_strided_slice %168 {offsets = [0, 6], sizes = [2, 256], strides = [1, 1]} : vector<2x262xf32> to vector<2x256xf32>
    %201 = vector.broadcast %199 : f32 to vector<2x256xf32>
    %202 = arith.mulf %200, %201 : vector<2x256xf32>
    %203 = arith.addf %167, %202 : vector<2x256xf32>
    %c0_40 = arith.constant 0 : index
    %c64 = arith.constant 64 : index
    %204 = vector.load %arg5[%c0_40, %c64] : memref<2x358xf32, #tpu.memory_space<vmem>>, vector<2x262xf32>
    %c28 = arith.constant 28 : index
    %205 = memref.load %arg1[%c28] : memref<99xf32, #tpu.memory_space<smem>>
    %206 = vector.extract_strided_slice %204 {offsets = [0, 0], sizes = [2, 256], strides = [1, 1]} : vector<2x262xf32> to vector<2x256xf32>
    %207 = vector.broadcast %205 : f32 to vector<2x256xf32>
    %208 = arith.mulf %206, %207 : vector<2x256xf32>
    %209 = arith.addf %173, %208 : vector<2x256xf32>
    %c29 = arith.constant 29 : index
    %210 = memref.load %arg1[%c29] : memref<99xf32, #tpu.memory_space<smem>>
    %211 = vector.extract_strided_slice %204 {offsets = [0, 1], sizes = [2, 256], strides = [1, 1]} : vector<2x262xf32> to vector<2x256xf32>
    %212 = vector.broadcast %210 : f32 to vector<2x256xf32>
    %213 = arith.mulf %211, %212 : vector<2x256xf32>
    %214 = arith.addf %178, %213 : vector<2x256xf32>
    %c30 = arith.constant 30 : index
    %215 = memref.load %arg1[%c30] : memref<99xf32, #tpu.memory_space<smem>>
    %216 = vector.extract_strided_slice %204 {offsets = [0, 2], sizes = [2, 256], strides = [1, 1]} : vector<2x262xf32> to vector<2x256xf32>
    %217 = vector.broadcast %215 : f32 to vector<2x256xf32>
    %218 = arith.mulf %216, %217 : vector<2x256xf32>
    %219 = arith.addf %183, %218 : vector<2x256xf32>
    %c31 = arith.constant 31 : index
    %220 = memref.load %arg1[%c31] : memref<99xf32, #tpu.memory_space<smem>>
    %221 = vector.extract_strided_slice %204 {offsets = [0, 3], sizes = [2, 256], strides = [1, 1]} : vector<2x262xf32> to vector<2x256xf32>
    %222 = vector.broadcast %220 : f32 to vector<2x256xf32>
    %223 = arith.mulf %221, %222 : vector<2x256xf32>
    %224 = arith.addf %188, %223 : vector<2x256xf32>
    %c32_41 = arith.constant 32 : index
    %225 = memref.load %arg1[%c32_41] : memref<99xf32, #tpu.memory_space<smem>>
    %226 = vector.extract_strided_slice %204 {offsets = [0, 4], sizes = [2, 256], strides = [1, 1]} : vector<2x262xf32> to vector<2x256xf32>
    %227 = vector.broadcast %225 : f32 to vector<2x256xf32>
    %228 = arith.mulf %226, %227 : vector<2x256xf32>
    %229 = arith.addf %193, %228 : vector<2x256xf32>
    %c33 = arith.constant 33 : index
    %230 = memref.load %arg1[%c33] : memref<99xf32, #tpu.memory_space<smem>>
    %231 = vector.extract_strided_slice %204 {offsets = [0, 5], sizes = [2, 256], strides = [1, 1]} : vector<2x262xf32> to vector<2x256xf32>
    %232 = vector.broadcast %230 : f32 to vector<2x256xf32>
    %233 = arith.mulf %231, %232 : vector<2x256xf32>
    %234 = arith.addf %198, %233 : vector<2x256xf32>
    %c34 = arith.constant 34 : index
    %235 = memref.load %arg1[%c34] : memref<99xf32, #tpu.memory_space<smem>>
    %236 = vector.extract_strided_slice %204 {offsets = [0, 6], sizes = [2, 256], strides = [1, 1]} : vector<2x262xf32> to vector<2x256xf32>
    %237 = vector.broadcast %235 : f32 to vector<2x256xf32>
    %238 = arith.mulf %236, %237 : vector<2x256xf32>
    %239 = arith.addf %203, %238 : vector<2x256xf32>
    %c0_42 = arith.constant 0 : index
    %c80 = arith.constant 80 : index
    %240 = vector.load %arg5[%c0_42, %c80] : memref<2x358xf32, #tpu.memory_space<vmem>>, vector<2x262xf32>
    %c35 = arith.constant 35 : index
    %241 = memref.load %arg1[%c35] : memref<99xf32, #tpu.memory_space<smem>>
    %242 = vector.extract_strided_slice %240 {offsets = [0, 0], sizes = [2, 256], strides = [1, 1]} : vector<2x262xf32> to vector<2x256xf32>
    %243 = vector.broadcast %241 : f32 to vector<2x256xf32>
    %244 = arith.mulf %242, %243 : vector<2x256xf32>
    %245 = arith.addf %209, %244 : vector<2x256xf32>
    %c36 = arith.constant 36 : index
    %246 = memref.load %arg1[%c36] : memref<99xf32, #tpu.memory_space<smem>>
    %247 = vector.extract_strided_slice %240 {offsets = [0, 1], sizes = [2, 256], strides = [1, 1]} : vector<2x262xf32> to vector<2x256xf32>
    %248 = vector.broadcast %246 : f32 to vector<2x256xf32>
    %249 = arith.mulf %247, %248 : vector<2x256xf32>
    %250 = arith.addf %214, %249 : vector<2x256xf32>
    %c37 = arith.constant 37 : index
    %251 = memref.load %arg1[%c37] : memref<99xf32, #tpu.memory_space<smem>>
    %252 = vector.extract_strided_slice %240 {offsets = [0, 2], sizes = [2, 256], strides = [1, 1]} : vector<2x262xf32> to vector<2x256xf32>
    %253 = vector.broadcast %251 : f32 to vector<2x256xf32>
    %254 = arith.mulf %252, %253 : vector<2x256xf32>
    %255 = arith.addf %219, %254 : vector<2x256xf32>
    %c38 = arith.constant 38 : index
    %256 = memref.load %arg1[%c38] : memref<99xf32, #tpu.memory_space<smem>>
    %257 = vector.extract_strided_slice %240 {offsets = [0, 3], sizes = [2, 256], strides = [1, 1]} : vector<2x262xf32> to vector<2x256xf32>
    %258 = vector.broadcast %256 : f32 to vector<2x256xf32>
    %259 = arith.mulf %257, %258 : vector<2x256xf32>
    %260 = arith.addf %224, %259 : vector<2x256xf32>
    %c39 = arith.constant 39 : index
    %261 = memref.load %arg1[%c39] : memref<99xf32, #tpu.memory_space<smem>>
    %262 = vector.extract_strided_slice %240 {offsets = [0, 4], sizes = [2, 256], strides = [1, 1]} : vector<2x262xf32> to vector<2x256xf32>
    %263 = vector.broadcast %261 : f32 to vector<2x256xf32>
    %264 = arith.mulf %262, %263 : vector<2x256xf32>
    %265 = arith.addf %229, %264 : vector<2x256xf32>
    %c40 = arith.constant 40 : index
    %266 = memref.load %arg1[%c40] : memref<99xf32, #tpu.memory_space<smem>>
    %267 = vector.extract_strided_slice %240 {offsets = [0, 5], sizes = [2, 256], strides = [1, 1]} : vector<2x262xf32> to vector<2x256xf32>
    %268 = vector.broadcast %266 : f32 to vector<2x256xf32>
    %269 = arith.mulf %267, %268 : vector<2x256xf32>
    %270 = arith.addf %234, %269 : vector<2x256xf32>
    %c41 = arith.constant 41 : index
    %271 = memref.load %arg1[%c41] : memref<99xf32, #tpu.memory_space<smem>>
    %272 = vector.extract_strided_slice %240 {offsets = [0, 6], sizes = [2, 256], strides = [1, 1]} : vector<2x262xf32> to vector<2x256xf32>
    %273 = vector.broadcast %271 : f32 to vector<2x256xf32>
    %274 = arith.mulf %272, %273 : vector<2x256xf32>
    %275 = arith.addf %239, %274 : vector<2x256xf32>
    %c0_43 = arith.constant 0 : index
    %c96 = arith.constant 96 : index
    %276 = vector.load %arg5[%c0_43, %c96] : memref<2x358xf32, #tpu.memory_space<vmem>>, vector<2x262xf32>
    %c42 = arith.constant 42 : index
    %277 = memref.load %arg1[%c42] : memref<99xf32, #tpu.memory_space<smem>>
    %278 = vector.extract_strided_slice %276 {offsets = [0, 0], sizes = [2, 256], strides = [1, 1]} : vector<2x262xf32> to vector<2x256xf32>
    %279 = vector.broadcast %277 : f32 to vector<2x256xf32>
    %280 = arith.mulf %278, %279 : vector<2x256xf32>
    %281 = arith.addf %245, %280 : vector<2x256xf32>
    %c43 = arith.constant 43 : index
    %282 = memref.load %arg1[%c43] : memref<99xf32, #tpu.memory_space<smem>>
    %283 = vector.extract_strided_slice %276 {offsets = [0, 1], sizes = [2, 256], strides = [1, 1]} : vector<2x262xf32> to vector<2x256xf32>
    %284 = vector.broadcast %282 : f32 to vector<2x256xf32>
    %285 = arith.mulf %283, %284 : vector<2x256xf32>
    %286 = arith.addf %250, %285 : vector<2x256xf32>
    %c44 = arith.constant 44 : index
    %287 = memref.load %arg1[%c44] : memref<99xf32, #tpu.memory_space<smem>>
    %288 = vector.extract_strided_slice %276 {offsets = [0, 2], sizes = [2, 256], strides = [1, 1]} : vector<2x262xf32> to vector<2x256xf32>
    %289 = vector.broadcast %287 : f32 to vector<2x256xf32>
    %290 = arith.mulf %288, %289 : vector<2x256xf32>
    %291 = arith.addf %255, %290 : vector<2x256xf32>
    %c45 = arith.constant 45 : index
    %292 = memref.load %arg1[%c45] : memref<99xf32, #tpu.memory_space<smem>>
    %293 = vector.extract_strided_slice %276 {offsets = [0, 3], sizes = [2, 256], strides = [1, 1]} : vector<2x262xf32> to vector<2x256xf32>
    %294 = vector.broadcast %292 : f32 to vector<2x256xf32>
    %295 = arith.mulf %293, %294 : vector<2x256xf32>
    %296 = arith.addf %260, %295 : vector<2x256xf32>
    %c46 = arith.constant 46 : index
    %297 = memref.load %arg1[%c46] : memref<99xf32, #tpu.memory_space<smem>>
    %298 = vector.extract_strided_slice %276 {offsets = [0, 4], sizes = [2, 256], strides = [1, 1]} : vector<2x262xf32> to vector<2x256xf32>
    %299 = vector.broadcast %297 : f32 to vector<2x256xf32>
    %300 = arith.mulf %298, %299 : vector<2x256xf32>
    %301 = arith.addf %265, %300 : vector<2x256xf32>
    %c47 = arith.constant 47 : index
    %302 = memref.load %arg1[%c47] : memref<99xf32, #tpu.memory_space<smem>>
    %303 = vector.extract_strided_slice %276 {offsets = [0, 5], sizes = [2, 256], strides = [1, 1]} : vector<2x262xf32> to vector<2x256xf32>
    %304 = vector.broadcast %302 : f32 to vector<2x256xf32>
    %305 = arith.mulf %303, %304 : vector<2x256xf32>
    %306 = arith.addf %270, %305 : vector<2x256xf32>
    %c48_44 = arith.constant 48 : index
    %307 = memref.load %arg1[%c48_44] : memref<99xf32, #tpu.memory_space<smem>>
    %308 = vector.extract_strided_slice %276 {offsets = [0, 6], sizes = [2, 256], strides = [1, 1]} : vector<2x262xf32> to vector<2x256xf32>
    %309 = vector.broadcast %307 : f32 to vector<2x256xf32>
    %310 = arith.mulf %308, %309 : vector<2x256xf32>
    %311 = arith.addf %275, %310 : vector<2x256xf32>
    %c0_45 = arith.constant 0 : index
    %c0_46 = arith.constant 0 : index
    %312 = vector.load %arg6[%c0_45, %c0_46] : memref<2x358xf32, #tpu.memory_space<vmem>>, vector<2x262xf32>
    %c49 = arith.constant 49 : index
    %313 = memref.load %arg1[%c49] : memref<99xf32, #tpu.memory_space<smem>>
    %314 = vector.extract_strided_slice %312 {offsets = [0, 0], sizes = [2, 256], strides = [1, 1]} : vector<2x262xf32> to vector<2x256xf32>
    %315 = vector.broadcast %313 : f32 to vector<2x256xf32>
    %316 = arith.mulf %314, %315 : vector<2x256xf32>
    %317 = arith.addf %281, %316 : vector<2x256xf32>
    %c50 = arith.constant 50 : index
    %318 = memref.load %arg1[%c50] : memref<99xf32, #tpu.memory_space<smem>>
    %319 = vector.extract_strided_slice %312 {offsets = [0, 1], sizes = [2, 256], strides = [1, 1]} : vector<2x262xf32> to vector<2x256xf32>
    %320 = vector.broadcast %318 : f32 to vector<2x256xf32>
    %321 = arith.mulf %319, %320 : vector<2x256xf32>
    %322 = arith.addf %286, %321 : vector<2x256xf32>
    %c51_47 = arith.constant 51 : index
    %323 = memref.load %arg1[%c51_47] : memref<99xf32, #tpu.memory_space<smem>>
    %324 = vector.extract_strided_slice %312 {offsets = [0, 2], sizes = [2, 256], strides = [1, 1]} : vector<2x262xf32> to vector<2x256xf32>
    %325 = vector.broadcast %323 : f32 to vector<2x256xf32>
    %326 = arith.mulf %324, %325 : vector<2x256xf32>
    %327 = arith.addf %291, %326 : vector<2x256xf32>
    %c52 = arith.constant 52 : index
    %328 = memref.load %arg1[%c52] : memref<99xf32, #tpu.memory_space<smem>>
    %329 = vector.extract_strided_slice %312 {offsets = [0, 3], sizes = [2, 256], strides = [1, 1]} : vector<2x262xf32> to vector<2x256xf32>
    %330 = vector.broadcast %328 : f32 to vector<2x256xf32>
    %331 = arith.mulf %329, %330 : vector<2x256xf32>
    %332 = arith.addf %296, %331 : vector<2x256xf32>
    %c53 = arith.constant 53 : index
    %333 = memref.load %arg1[%c53] : memref<99xf32, #tpu.memory_space<smem>>
    %334 = vector.extract_strided_slice %312 {offsets = [0, 4], sizes = [2, 256], strides = [1, 1]} : vector<2x262xf32> to vector<2x256xf32>
    %335 = vector.broadcast %333 : f32 to vector<2x256xf32>
    %336 = arith.mulf %334, %335 : vector<2x256xf32>
    %337 = arith.addf %301, %336 : vector<2x256xf32>
    %c54 = arith.constant 54 : index
    %338 = memref.load %arg1[%c54] : memref<99xf32, #tpu.memory_space<smem>>
    %339 = vector.extract_strided_slice %312 {offsets = [0, 5], sizes = [2, 256], strides = [1, 1]} : vector<2x262xf32> to vector<2x256xf32>
    %340 = vector.broadcast %338 : f32 to vector<2x256xf32>
    %341 = arith.mulf %339, %340 : vector<2x256xf32>
    %342 = arith.addf %306, %341 : vector<2x256xf32>
    %c55 = arith.constant 55 : index
    %343 = memref.load %arg1[%c55] : memref<99xf32, #tpu.memory_space<smem>>
    %344 = vector.extract_strided_slice %312 {offsets = [0, 6], sizes = [2, 256], strides = [1, 1]} : vector<2x262xf32> to vector<2x256xf32>
    %345 = vector.broadcast %343 : f32 to vector<2x256xf32>
    %346 = arith.mulf %344, %345 : vector<2x256xf32>
    %347 = arith.addf %311, %346 : vector<2x256xf32>
    %c0_48 = arith.constant 0 : index
    %c16_49 = arith.constant 16 : index
    %348 = vector.load %arg6[%c0_48, %c16_49] : memref<2x358xf32, #tpu.memory_space<vmem>>, vector<2x262xf32>
    %c56 = arith.constant 56 : index
    %349 = memref.load %arg1[%c56] : memref<99xf32, #tpu.memory_space<smem>>
    %350 = vector.extract_strided_slice %348 {offsets = [0, 0], sizes = [2, 256], strides = [1, 1]} : vector<2x262xf32> to vector<2x256xf32>
    %351 = vector.broadcast %349 : f32 to vector<2x256xf32>
    %352 = arith.mulf %350, %351 : vector<2x256xf32>
    %353 = arith.addf %317, %352 : vector<2x256xf32>
    %c57 = arith.constant 57 : index
    %354 = memref.load %arg1[%c57] : memref<99xf32, #tpu.memory_space<smem>>
    %355 = vector.extract_strided_slice %348 {offsets = [0, 1], sizes = [2, 256], strides = [1, 1]} : vector<2x262xf32> to vector<2x256xf32>
    %356 = vector.broadcast %354 : f32 to vector<2x256xf32>
    %357 = arith.mulf %355, %356 : vector<2x256xf32>
    %358 = arith.addf %322, %357 : vector<2x256xf32>
    %c58 = arith.constant 58 : index
    %359 = memref.load %arg1[%c58] : memref<99xf32, #tpu.memory_space<smem>>
    %360 = vector.extract_strided_slice %348 {offsets = [0, 2], sizes = [2, 256], strides = [1, 1]} : vector<2x262xf32> to vector<2x256xf32>
    %361 = vector.broadcast %359 : f32 to vector<2x256xf32>
    %362 = arith.mulf %360, %361 : vector<2x256xf32>
    %363 = arith.addf %327, %362 : vector<2x256xf32>
    %c59 = arith.constant 59 : index
    %364 = memref.load %arg1[%c59] : memref<99xf32, #tpu.memory_space<smem>>
    %365 = vector.extract_strided_slice %348 {offsets = [0, 3], sizes = [2, 256], strides = [1, 1]} : vector<2x262xf32> to vector<2x256xf32>
    %366 = vector.broadcast %364 : f32 to vector<2x256xf32>
    %367 = arith.mulf %365, %366 : vector<2x256xf32>
    %368 = arith.addf %332, %367 : vector<2x256xf32>
    %c60 = arith.constant 60 : index
    %369 = memref.load %arg1[%c60] : memref<99xf32, #tpu.memory_space<smem>>
    %370 = vector.extract_strided_slice %348 {offsets = [0, 4], sizes = [2, 256], strides = [1, 1]} : vector<2x262xf32> to vector<2x256xf32>
    %371 = vector.broadcast %369 : f32 to vector<2x256xf32>
    %372 = arith.mulf %370, %371 : vector<2x256xf32>
    %373 = arith.addf %337, %372 : vector<2x256xf32>
    %c61 = arith.constant 61 : index
    %374 = memref.load %arg1[%c61] : memref<99xf32, #tpu.memory_space<smem>>
    %375 = vector.extract_strided_slice %348 {offsets = [0, 5], sizes = [2, 256], strides = [1, 1]} : vector<2x262xf32> to vector<2x256xf32>
    %376 = vector.broadcast %374 : f32 to vector<2x256xf32>
    %377 = arith.mulf %375, %376 : vector<2x256xf32>
    %378 = arith.addf %342, %377 : vector<2x256xf32>
    %c62 = arith.constant 62 : index
    %379 = memref.load %arg1[%c62] : memref<99xf32, #tpu.memory_space<smem>>
    %380 = vector.extract_strided_slice %348 {offsets = [0, 6], sizes = [2, 256], strides = [1, 1]} : vector<2x262xf32> to vector<2x256xf32>
    %381 = vector.broadcast %379 : f32 to vector<2x256xf32>
    %382 = arith.mulf %380, %381 : vector<2x256xf32>
    %383 = arith.addf %347, %382 : vector<2x256xf32>
    %c0_50 = arith.constant 0 : index
    %c32_51 = arith.constant 32 : index
    %384 = vector.load %arg6[%c0_50, %c32_51] : memref<2x358xf32, #tpu.memory_space<vmem>>, vector<2x262xf32>
    %c63 = arith.constant 63 : index
    %385 = memref.load %arg1[%c63] : memref<99xf32, #tpu.memory_space<smem>>
    %386 = vector.extract_strided_slice %384 {offsets = [0, 0], sizes = [2, 256], strides = [1, 1]} : vector<2x262xf32> to vector<2x256xf32>
    %387 = vector.broadcast %385 : f32 to vector<2x256xf32>
    %388 = arith.mulf %386, %387 : vector<2x256xf32>
    %389 = arith.addf %353, %388 : vector<2x256xf32>
    %c64_52 = arith.constant 64 : index
    %390 = memref.load %arg1[%c64_52] : memref<99xf32, #tpu.memory_space<smem>>
    %391 = vector.extract_strided_slice %384 {offsets = [0, 1], sizes = [2, 256], strides = [1, 1]} : vector<2x262xf32> to vector<2x256xf32>
    %392 = vector.broadcast %390 : f32 to vector<2x256xf32>
    %393 = arith.mulf %391, %392 : vector<2x256xf32>
    %394 = arith.addf %358, %393 : vector<2x256xf32>
    %c65 = arith.constant 65 : index
    %395 = memref.load %arg1[%c65] : memref<99xf32, #tpu.memory_space<smem>>
    %396 = vector.extract_strided_slice %384 {offsets = [0, 2], sizes = [2, 256], strides = [1, 1]} : vector<2x262xf32> to vector<2x256xf32>
    %397 = vector.broadcast %395 : f32 to vector<2x256xf32>
    %398 = arith.mulf %396, %397 : vector<2x256xf32>
    %399 = arith.addf %363, %398 : vector<2x256xf32>
    %c66 = arith.constant 66 : index
    %400 = memref.load %arg1[%c66] : memref<99xf32, #tpu.memory_space<smem>>
    %401 = vector.extract_strided_slice %384 {offsets = [0, 3], sizes = [2, 256], strides = [1, 1]} : vector<2x262xf32> to vector<2x256xf32>
    %402 = vector.broadcast %400 : f32 to vector<2x256xf32>
    %403 = arith.mulf %401, %402 : vector<2x256xf32>
    %404 = arith.addf %368, %403 : vector<2x256xf32>
    %c67 = arith.constant 67 : index
    %405 = memref.load %arg1[%c67] : memref<99xf32, #tpu.memory_space<smem>>
    %406 = vector.extract_strided_slice %384 {offsets = [0, 4], sizes = [2, 256], strides = [1, 1]} : vector<2x262xf32> to vector<2x256xf32>
    %407 = vector.broadcast %405 : f32 to vector<2x256xf32>
    %408 = arith.mulf %406, %407 : vector<2x256xf32>
    %409 = arith.addf %373, %408 : vector<2x256xf32>
    %c68 = arith.constant 68 : index
    %410 = memref.load %arg1[%c68] : memref<99xf32, #tpu.memory_space<smem>>
    %411 = vector.extract_strided_slice %384 {offsets = [0, 5], sizes = [2, 256], strides = [1, 1]} : vector<2x262xf32> to vector<2x256xf32>
    %412 = vector.broadcast %410 : f32 to vector<2x256xf32>
    %413 = arith.mulf %411, %412 : vector<2x256xf32>
    %414 = arith.addf %378, %413 : vector<2x256xf32>
    %c69 = arith.constant 69 : index
    %415 = memref.load %arg1[%c69] : memref<99xf32, #tpu.memory_space<smem>>
    %416 = vector.extract_strided_slice %384 {offsets = [0, 6], sizes = [2, 256], strides = [1, 1]} : vector<2x262xf32> to vector<2x256xf32>
    %417 = vector.broadcast %415 : f32 to vector<2x256xf32>
    %418 = arith.mulf %416, %417 : vector<2x256xf32>
    %419 = arith.addf %383, %418 : vector<2x256xf32>
    %c0_53 = arith.constant 0 : index
    %c48_54 = arith.constant 48 : index
    %420 = vector.load %arg6[%c0_53, %c48_54] : memref<2x358xf32, #tpu.memory_space<vmem>>, vector<2x262xf32>
    %c70 = arith.constant 70 : index
    %421 = memref.load %arg1[%c70] : memref<99xf32, #tpu.memory_space<smem>>
    %422 = vector.extract_strided_slice %420 {offsets = [0, 0], sizes = [2, 256], strides = [1, 1]} : vector<2x262xf32> to vector<2x256xf32>
    %423 = vector.broadcast %421 : f32 to vector<2x256xf32>
    %424 = arith.mulf %422, %423 : vector<2x256xf32>
    %425 = arith.addf %389, %424 : vector<2x256xf32>
    %c71 = arith.constant 71 : index
    %426 = memref.load %arg1[%c71] : memref<99xf32, #tpu.memory_space<smem>>
    %427 = vector.extract_strided_slice %420 {offsets = [0, 1], sizes = [2, 256], strides = [1, 1]} : vector<2x262xf32> to vector<2x256xf32>
    %428 = vector.broadcast %426 : f32 to vector<2x256xf32>
    %429 = arith.mulf %427, %428 : vector<2x256xf32>
    %430 = arith.addf %394, %429 : vector<2x256xf32>
    %c72 = arith.constant 72 : index
    %431 = memref.load %arg1[%c72] : memref<99xf32, #tpu.memory_space<smem>>
    %432 = vector.extract_strided_slice %420 {offsets = [0, 2], sizes = [2, 256], strides = [1, 1]} : vector<2x262xf32> to vector<2x256xf32>
    %433 = vector.broadcast %431 : f32 to vector<2x256xf32>
    %434 = arith.mulf %432, %433 : vector<2x256xf32>
    %435 = arith.addf %399, %434 : vector<2x256xf32>
    %c73 = arith.constant 73 : index
    %436 = memref.load %arg1[%c73] : memref<99xf32, #tpu.memory_space<smem>>
    %437 = vector.extract_strided_slice %420 {offsets = [0, 3], sizes = [2, 256], strides = [1, 1]} : vector<2x262xf32> to vector<2x256xf32>
    %438 = vector.broadcast %436 : f32 to vector<2x256xf32>
    %439 = arith.mulf %437, %438 : vector<2x256xf32>
    %440 = arith.addf %404, %439 : vector<2x256xf32>
    %c74 = arith.constant 74 : index
    %441 = memref.load %arg1[%c74] : memref<99xf32, #tpu.memory_space<smem>>
    %442 = vector.extract_strided_slice %420 {offsets = [0, 4], sizes = [2, 256], strides = [1, 1]} : vector<2x262xf32> to vector<2x256xf32>
    %443 = vector.broadcast %441 : f32 to vector<2x256xf32>
    %444 = arith.mulf %442, %443 : vector<2x256xf32>
    %445 = arith.addf %409, %444 : vector<2x256xf32>
    %c75 = arith.constant 75 : index
    %446 = memref.load %arg1[%c75] : memref<99xf32, #tpu.memory_space<smem>>
    %447 = vector.extract_strided_slice %420 {offsets = [0, 5], sizes = [2, 256], strides = [1, 1]} : vector<2x262xf32> to vector<2x256xf32>
    %448 = vector.broadcast %446 : f32 to vector<2x256xf32>
    %449 = arith.mulf %447, %448 : vector<2x256xf32>
    %450 = arith.addf %414, %449 : vector<2x256xf32>
    %c76 = arith.constant 76 : index
    %451 = memref.load %arg1[%c76] : memref<99xf32, #tpu.memory_space<smem>>
    %452 = vector.extract_strided_slice %420 {offsets = [0, 6], sizes = [2, 256], strides = [1, 1]} : vector<2x262xf32> to vector<2x256xf32>
    %453 = vector.broadcast %451 : f32 to vector<2x256xf32>
    %454 = arith.mulf %452, %453 : vector<2x256xf32>
    %455 = arith.addf %419, %454 : vector<2x256xf32>
    %c0_55 = arith.constant 0 : index
    %c64_56 = arith.constant 64 : index
    %456 = vector.load %arg6[%c0_55, %c64_56] : memref<2x358xf32, #tpu.memory_space<vmem>>, vector<2x262xf32>
    %c77 = arith.constant 77 : index
    %457 = memref.load %arg1[%c77] : memref<99xf32, #tpu.memory_space<smem>>
    %458 = vector.extract_strided_slice %456 {offsets = [0, 0], sizes = [2, 256], strides = [1, 1]} : vector<2x262xf32> to vector<2x256xf32>
    %459 = vector.broadcast %457 : f32 to vector<2x256xf32>
    %460 = arith.mulf %458, %459 : vector<2x256xf32>
    %461 = arith.addf %425, %460 : vector<2x256xf32>
    %c78 = arith.constant 78 : index
    %462 = memref.load %arg1[%c78] : memref<99xf32, #tpu.memory_space<smem>>
    %463 = vector.extract_strided_slice %456 {offsets = [0, 1], sizes = [2, 256], strides = [1, 1]} : vector<2x262xf32> to vector<2x256xf32>
    %464 = vector.broadcast %462 : f32 to vector<2x256xf32>
    %465 = arith.mulf %463, %464 : vector<2x256xf32>
    %466 = arith.addf %430, %465 : vector<2x256xf32>
    %c79 = arith.constant 79 : index
    %467 = memref.load %arg1[%c79] : memref<99xf32, #tpu.memory_space<smem>>
    %468 = vector.extract_strided_slice %456 {offsets = [0, 2], sizes = [2, 256], strides = [1, 1]} : vector<2x262xf32> to vector<2x256xf32>
    %469 = vector.broadcast %467 : f32 to vector<2x256xf32>
    %470 = arith.mulf %468, %469 : vector<2x256xf32>
    %471 = arith.addf %435, %470 : vector<2x256xf32>
    %c80_57 = arith.constant 80 : index
    %472 = memref.load %arg1[%c80_57] : memref<99xf32, #tpu.memory_space<smem>>
    %473 = vector.extract_strided_slice %456 {offsets = [0, 3], sizes = [2, 256], strides = [1, 1]} : vector<2x262xf32> to vector<2x256xf32>
    %474 = vector.broadcast %472 : f32 to vector<2x256xf32>
    %475 = arith.mulf %473, %474 : vector<2x256xf32>
    %476 = arith.addf %440, %475 : vector<2x256xf32>
    %c81 = arith.constant 81 : index
    %477 = memref.load %arg1[%c81] : memref<99xf32, #tpu.memory_space<smem>>
    %478 = vector.extract_strided_slice %456 {offsets = [0, 4], sizes = [2, 256], strides = [1, 1]} : vector<2x262xf32> to vector<2x256xf32>
    %479 = vector.broadcast %477 : f32 to vector<2x256xf32>
    %480 = arith.mulf %478, %479 : vector<2x256xf32>
    %481 = arith.addf %445, %480 : vector<2x256xf32>
    %c82 = arith.constant 82 : index
    %482 = memref.load %arg1[%c82] : memref<99xf32, #tpu.memory_space<smem>>
    %483 = vector.extract_strided_slice %456 {offsets = [0, 5], sizes = [2, 256], strides = [1, 1]} : vector<2x262xf32> to vector<2x256xf32>
    %484 = vector.broadcast %482 : f32 to vector<2x256xf32>
    %485 = arith.mulf %483, %484 : vector<2x256xf32>
    %486 = arith.addf %450, %485 : vector<2x256xf32>
    %c83 = arith.constant 83 : index
    %487 = memref.load %arg1[%c83] : memref<99xf32, #tpu.memory_space<smem>>
    %488 = vector.extract_strided_slice %456 {offsets = [0, 6], sizes = [2, 256], strides = [1, 1]} : vector<2x262xf32> to vector<2x256xf32>
    %489 = vector.broadcast %487 : f32 to vector<2x256xf32>
    %490 = arith.mulf %488, %489 : vector<2x256xf32>
    %491 = arith.addf %455, %490 : vector<2x256xf32>
    %c0_58 = arith.constant 0 : index
    %c80_59 = arith.constant 80 : index
    %492 = vector.load %arg6[%c0_58, %c80_59] : memref<2x358xf32, #tpu.memory_space<vmem>>, vector<2x262xf32>
    %c84 = arith.constant 84 : index
    %493 = memref.load %arg1[%c84] : memref<99xf32, #tpu.memory_space<smem>>
    %494 = vector.extract_strided_slice %492 {offsets = [0, 0], sizes = [2, 256], strides = [1, 1]} : vector<2x262xf32> to vector<2x256xf32>
    %495 = vector.broadcast %493 : f32 to vector<2x256xf32>
    %496 = arith.mulf %494, %495 : vector<2x256xf32>
    %497 = arith.addf %461, %496 : vector<2x256xf32>
    %c85 = arith.constant 85 : index
    %498 = memref.load %arg1[%c85] : memref<99xf32, #tpu.memory_space<smem>>
    %499 = vector.extract_strided_slice %492 {offsets = [0, 1], sizes = [2, 256], strides = [1, 1]} : vector<2x262xf32> to vector<2x256xf32>
    %500 = vector.broadcast %498 : f32 to vector<2x256xf32>
    %501 = arith.mulf %499, %500 : vector<2x256xf32>
    %502 = arith.addf %466, %501 : vector<2x256xf32>
    %c86 = arith.constant 86 : index
    %503 = memref.load %arg1[%c86] : memref<99xf32, #tpu.memory_space<smem>>
    %504 = vector.extract_strided_slice %492 {offsets = [0, 2], sizes = [2, 256], strides = [1, 1]} : vector<2x262xf32> to vector<2x256xf32>
    %505 = vector.broadcast %503 : f32 to vector<2x256xf32>
    %506 = arith.mulf %504, %505 : vector<2x256xf32>
    %507 = arith.addf %471, %506 : vector<2x256xf32>
    %c87 = arith.constant 87 : index
    %508 = memref.load %arg1[%c87] : memref<99xf32, #tpu.memory_space<smem>>
    %509 = vector.extract_strided_slice %492 {offsets = [0, 3], sizes = [2, 256], strides = [1, 1]} : vector<2x262xf32> to vector<2x256xf32>
    %510 = vector.broadcast %508 : f32 to vector<2x256xf32>
    %511 = arith.mulf %509, %510 : vector<2x256xf32>
    %512 = arith.addf %476, %511 : vector<2x256xf32>
    %c88 = arith.constant 88 : index
    %513 = memref.load %arg1[%c88] : memref<99xf32, #tpu.memory_space<smem>>
    %514 = vector.extract_strided_slice %492 {offsets = [0, 4], sizes = [2, 256], strides = [1, 1]} : vector<2x262xf32> to vector<2x256xf32>
    %515 = vector.broadcast %513 : f32 to vector<2x256xf32>
    %516 = arith.mulf %514, %515 : vector<2x256xf32>
    %517 = arith.addf %481, %516 : vector<2x256xf32>
    %c89 = arith.constant 89 : index
    %518 = memref.load %arg1[%c89] : memref<99xf32, #tpu.memory_space<smem>>
    %519 = vector.extract_strided_slice %492 {offsets = [0, 5], sizes = [2, 256], strides = [1, 1]} : vector<2x262xf32> to vector<2x256xf32>
    %520 = vector.broadcast %518 : f32 to vector<2x256xf32>
    %521 = arith.mulf %519, %520 : vector<2x256xf32>
    %522 = arith.addf %486, %521 : vector<2x256xf32>
    %c90 = arith.constant 90 : index
    %523 = memref.load %arg1[%c90] : memref<99xf32, #tpu.memory_space<smem>>
    %524 = vector.extract_strided_slice %492 {offsets = [0, 6], sizes = [2, 256], strides = [1, 1]} : vector<2x262xf32> to vector<2x256xf32>
    %525 = vector.broadcast %523 : f32 to vector<2x256xf32>
    %526 = arith.mulf %524, %525 : vector<2x256xf32>
    %527 = arith.addf %491, %526 : vector<2x256xf32>
    %c0_60 = arith.constant 0 : index
    %c96_61 = arith.constant 96 : index
    %528 = vector.load %arg6[%c0_60, %c96_61] : memref<2x358xf32, #tpu.memory_space<vmem>>, vector<2x262xf32>
    %c91 = arith.constant 91 : index
    %529 = memref.load %arg1[%c91] : memref<99xf32, #tpu.memory_space<smem>>
    %530 = vector.extract_strided_slice %528 {offsets = [0, 0], sizes = [2, 256], strides = [1, 1]} : vector<2x262xf32> to vector<2x256xf32>
    %531 = vector.broadcast %529 : f32 to vector<2x256xf32>
    %532 = arith.mulf %530, %531 : vector<2x256xf32>
    %533 = arith.addf %497, %532 : vector<2x256xf32>
    %c92 = arith.constant 92 : index
    %534 = memref.load %arg1[%c92] : memref<99xf32, #tpu.memory_space<smem>>
    %535 = vector.extract_strided_slice %528 {offsets = [0, 1], sizes = [2, 256], strides = [1, 1]} : vector<2x262xf32> to vector<2x256xf32>
    %536 = vector.broadcast %534 : f32 to vector<2x256xf32>
    %537 = arith.mulf %535, %536 : vector<2x256xf32>
    %538 = arith.addf %502, %537 : vector<2x256xf32>
    %c93 = arith.constant 93 : index
    %539 = memref.load %arg1[%c93] : memref<99xf32, #tpu.memory_space<smem>>
    %540 = vector.extract_strided_slice %528 {offsets = [0, 2], sizes = [2, 256], strides = [1, 1]} : vector<2x262xf32> to vector<2x256xf32>
    %541 = vector.broadcast %539 : f32 to vector<2x256xf32>
    %542 = arith.mulf %540, %541 : vector<2x256xf32>
    %543 = arith.addf %507, %542 : vector<2x256xf32>
    %c94 = arith.constant 94 : index
    %544 = memref.load %arg1[%c94] : memref<99xf32, #tpu.memory_space<smem>>
    %545 = vector.extract_strided_slice %528 {offsets = [0, 3], sizes = [2, 256], strides = [1, 1]} : vector<2x262xf32> to vector<2x256xf32>
    %546 = vector.broadcast %544 : f32 to vector<2x256xf32>
    %547 = arith.mulf %545, %546 : vector<2x256xf32>
    %548 = arith.addf %512, %547 : vector<2x256xf32>
    %c95 = arith.constant 95 : index
    %549 = memref.load %arg1[%c95] : memref<99xf32, #tpu.memory_space<smem>>
    %550 = vector.extract_strided_slice %528 {offsets = [0, 4], sizes = [2, 256], strides = [1, 1]} : vector<2x262xf32> to vector<2x256xf32>
    %551 = vector.broadcast %549 : f32 to vector<2x256xf32>
    %552 = arith.mulf %550, %551 : vector<2x256xf32>
    %553 = arith.addf %517, %552 : vector<2x256xf32>
    %c96_62 = arith.constant 96 : index
    %554 = memref.load %arg1[%c96_62] : memref<99xf32, #tpu.memory_space<smem>>
    %555 = vector.extract_strided_slice %528 {offsets = [0, 5], sizes = [2, 256], strides = [1, 1]} : vector<2x262xf32> to vector<2x256xf32>
    %556 = vector.broadcast %554 : f32 to vector<2x256xf32>
    %557 = arith.mulf %555, %556 : vector<2x256xf32>
    %558 = arith.addf %522, %557 : vector<2x256xf32>
    %c97 = arith.constant 97 : index
    %559 = memref.load %arg1[%c97] : memref<99xf32, #tpu.memory_space<smem>>
    %560 = vector.extract_strided_slice %528 {offsets = [0, 6], sizes = [2, 256], strides = [1, 1]} : vector<2x262xf32> to vector<2x256xf32>
    %561 = vector.broadcast %559 : f32 to vector<2x256xf32>
    %562 = arith.mulf %560, %561 : vector<2x256xf32>
    %563 = arith.addf %527, %562 : vector<2x256xf32>
    %c98 = arith.constant 98 : index
    %564 = memref.load %arg1[%c98] : memref<99xf32, #tpu.memory_space<smem>>
    %565 = vector.broadcast %564 : f32 to vector<2x256xf32>
    %cst_63 = arith.constant 0.000000e+00 : f32
    %566 = vector.shape_cast %21 : vector<1x256xi1> to vector<1x256xi1>
    %567 = vector.broadcast %566 : vector<1x256xi1> to vector<2x256xi1>
    %568 = vector.broadcast %cst_63 : f32 to vector<2x256xf32>
    %569 = arith.select %567, %533, %568 : vector<2x256xi1>, vector<2x256xf32>
    %570 = arith.addf %565, %569 : vector<2x256xf32>
    %cst_64 = arith.constant 0.000000e+00 : f32
    %571 = vector.shape_cast %30 : vector<1x256xi1> to vector<1x256xi1>
    %572 = vector.broadcast %571 : vector<1x256xi1> to vector<2x256xi1>
    %573 = vector.broadcast %cst_64 : f32 to vector<2x256xf32>
    %574 = arith.select %572, %538, %573 : vector<2x256xi1>, vector<2x256xf32>
    %575 = arith.addf %570, %574 : vector<2x256xf32>
    %cst_65 = arith.constant 0.000000e+00 : f32
    %576 = vector.shape_cast %39 : vector<1x256xi1> to vector<1x256xi1>
    %577 = vector.broadcast %576 : vector<1x256xi1> to vector<2x256xi1>
    %578 = vector.broadcast %cst_65 : f32 to vector<2x256xf32>
    %579 = arith.select %577, %543, %578 : vector<2x256xi1>, vector<2x256xf32>
    %580 = arith.addf %575, %579 : vector<2x256xf32>
    %581 = arith.addf %580, %548 : vector<2x256xf32>
    %cst_66 = arith.constant 0.000000e+00 : f32
    %582 = vector.shape_cast %48 : vector<1x256xi1> to vector<1x256xi1>
    %583 = vector.broadcast %582 : vector<1x256xi1> to vector<2x256xi1>
    %584 = vector.broadcast %cst_66 : f32 to vector<2x256xf32>
    %585 = arith.select %583, %553, %584 : vector<2x256xi1>, vector<2x256xf32>
    %586 = arith.addf %581, %585 : vector<2x256xf32>
    %cst_67 = arith.constant 0.000000e+00 : f32
    %587 = vector.shape_cast %57 : vector<1x256xi1> to vector<1x256xi1>
    %588 = vector.broadcast %587 : vector<1x256xi1> to vector<2x256xi1>
    %589 = vector.broadcast %cst_67 : f32 to vector<2x256xf32>
    %590 = arith.select %588, %558, %589 : vector<2x256xi1>, vector<2x256xf32>
    %591 = arith.addf %586, %590 : vector<2x256xf32>
    %cst_68 = arith.constant 0.000000e+00 : f32
    %592 = vector.shape_cast %66 : vector<1x256xi1> to vector<1x256xi1>
    %593 = vector.broadcast %592 : vector<1x256xi1> to vector<2x256xi1>
    %594 = vector.broadcast %cst_68 : f32 to vector<2x256xf32>
    %595 = arith.select %593, %563, %594 : vector<2x256xi1>, vector<2x256xf32>
    %596 = arith.addf %591, %595 : vector<2x256xf32>
    %597 = arith.negf %596 : vector<2x256xf32>
    %598 = math.exp %597 : vector<2x256xf32>
    %cst_69 = arith.constant 1.000000e+00 : f32
    %599 = vector.broadcast %cst_69 : f32 to vector<2x256xf32>
    %600 = arith.addf %599, %598 : vector<2x256xf32>
    %601 = arith.divf %599, %600 : vector<2x256xf32>
    %602 = vector.shape_cast %601 : vector<2x256xf32> to vector<2x1x256xf32>
    %603 = vector.broadcast %602 : vector<2x1x256xf32> to vector<2x4x256xf32>
    %604 = arith.mulf %0, %603 : vector<2x4x256xf32>
    %c0_70 = arith.constant 0 : index
    %c0_71 = arith.constant 0 : index
    %c0_72 = arith.constant 0 : index
    %605 = vector.load %arg4[%c0_70, %c0_71, %c0_72] : memref<2x4x256xf32, #tpu.memory_space<vmem>>, vector<2x4x256xf32>
    tpu.vector_store %arg4[%c0_70, %c0_71, %c0_72], %604 {strides = array<i32>} : memref<2x4x256xf32, #tpu.memory_space<vmem>>, vector<2x4x256xf32>,
    return
  }
  func.func @transform_0(%arg0: i32) -> i32 {
    %c0_i32 = arith.constant 0 : i32
    %c0_i32_0 = arith.constant 0 : i32
    return %c0_i32 : i32
  }
  func.func @transform_1(%arg0: i32) -> (i32, i32) {
    %c0_i32 = arith.constant 0 : i32
    %c0_i32_0 = arith.constant 0 : i32
    %c0_i32_1 = arith.constant 0 : i32
    return %c0_i32, %c0_i32_0 : i32, i32
  }
  func.func @transform_2(%arg0: i32) -> (i32, i32, i32) {
    %c0_i32 = arith.constant 0 : i32
    %c0_i32_0 = arith.constant 0 : i32
    %c0_i32_1 = arith.constant 0 : i32
    return %arg0, %c0_i32, %c0_i32_0 : i32, i32, i32
  }
  func.func @transform_3(%arg0: i32) -> (i32, i32, i32) {
    %c0_i32 = arith.constant 0 : i32
    %c0_i32_0 = arith.constant 0 : i32
    %c0_i32_1 = arith.constant 0 : i32
    return %arg0, %c0_i32, %c0_i32_0 : i32, i32, i32
  }
}

</mosaic_0001>

<llo_original>
// kernel: tpu_custom_call.1
$region0: #{tpu_custom_call.1}
  #allocation0 [shape = 'u32[]', space=smem, size = 0x4, offset = 0x4, fixed_abs, tag = 'smem constant byte address 0x4 - core index']
  #allocation1 [shape = 'u32[144,128]{1,0:T(1,128)}', space=vmem, size = 0x12000, scoped, tag = 'internal scratch']
  #allocation2 [shape = 'f32[2,358]{1,0:T(2,128)}', space=vmem, size = 0xc00, scoped, tag = 'scratch operand']
  #allocation3 [shape = 'f32[2,358]{1,0:T(2,128)}', space=vmem, size = 0xc00, scoped, tag = 'scratch operand']
  %s0 = inlined_call_operand.hbm [shape: f32[99], index: 0, kind: input, shape index: {}]
  %s1 = inlined_call_operand.hbm [shape: s32[1,256], index: 1, kind: input, shape index: {}]
  %s2 = inlined_call_operand.hbm [shape: f32[2,4,256], index: 2, kind: input, shape index: {}]
  %s3 = inlined_call_operand.hbm [shape: f32[2,4,256], index: 3, kind: output, shape index: {}]
  %s4 = sld [smem:[#allocation0]]
  $region34: #{tpu_custom_call.1} parent=0
    _
  %s6 = ssub.s32 1, %s4
  %s7 = scalar_select 0, %s6, %s4
  $region1: #{tpu_custom_call.1} parent=0
    #allocation4 [shape = 'u8[512]{0}', space=smem, size = 0x200, scoped, tag = 'input window, operand 0, single buffered']
    #allocation5 [shape = 's32[1]{0}', space=sflag, size = 0x4, scoped, tag = 'scoped memory for tpu_custom_call.1']
    #allocation6 [shape = 's32[1]{0}', space=sflag, size = 0x4, scoped, tag = 'scoped memory for tpu_custom_call.1']
    #allocation7 [shape = 's32[1]{0}', space=sflag, size = 0x4, scoped, tag = 'scoped memory for tpu_custom_call.1']
    #allocation8 [shape = 'u8[1024]{0}', space=vmem, size = 0x400, scoped, tag = 'input window, operand 1, single buffered']
    #allocation9 [shape = 'u8[8192]{0}', space=vmem, size = 0x2000, scoped, tag = 'input window, operand 2, single buffered']
    #allocation10 [shape = 's32[1]{0}', space=sflag, size = 0x4, scoped, tag = 'scoped memory for tpu_custom_call.1']
    #allocation11 [shape = 'u8[8192]{0}', space=vmem, size = 0x2000, scoped, tag = 'output window, operand 0, single buffered']
    %8 = vsyncpa [#allocation7], 0
    %9 = vsyncpa [#allocation5], 0
    %10 = vsyncpa [#allocation10], 0
    %11 = vsyncpa [#allocation6], 0
    // Predicated region
    $region2: #{tpu_custom_call.1} parent=1 // pred_check
      _
    $region3: #{tpu_custom_call.1} parent=1 // pred_check_branch
      %13 = sbr.rel (0) target = $region5
    $region4: #{tpu_custom_call.1} parent=1 // pred_region
      %s15 = ssub.s32 16, 16
      %16 = vsyncadd [#allocation7], %s15
      %19 = dma.hbm_to_smem %s0, 16, [#allocation4], [#allocation7]
    $region5: #{tpu_custom_call.1} parent=1 // pred_fallthru
      _
    // Predicated region
    $region6: #{tpu_custom_call.1} parent=1 // pred_check
      _
    $region7: #{tpu_custom_call.1} parent=1 // pred_check_branch
      %21 = sbr.rel (0) target = $region9
    $region8: #{tpu_custom_call.1} parent=1 // pred_region
      %s23 = ssub.s32 32, 32
      %24 = vsyncadd [#allocation5], %s23
      %s26 = sshll.u32 [#allocation8], 4
      %s27 = int_to_ptr.vmem [resolvable:$true] %s26
      %29 = dma.hbm_to_vmem [thread:$0]  %s1, 32, %s27, [#allocation5]
    $region9: #{tpu_custom_call.1} parent=1 // pred_fallthru
      _
    // Predicated region
    $region10: #{tpu_custom_call.1} parent=1 // pred_check
      _
    $region11: #{tpu_custom_call.1} parent=1 // pred_check_branch
      %31 = sbr.rel (0) target = $region13
    $region12: #{tpu_custom_call.1} parent=1 // pred_region
      %s33 = ssub.s32 256, 256
      %34 = vsyncadd [#allocation10], %s33
      %s35 = sshll.u32 [#allocation9], 4
      %s36 = int_to_ptr.vmem [resolvable:$true] %s35
      %41 = dma.hbm_to_vmem [thread:$0]  %s2, 256, %s36, [#allocation10], 128, 128, 8
    $region13: #{tpu_custom_call.1} parent=1 // pred_fallthru
      _
    // Predicated region
    $region14: #{tpu_custom_call.1} parent=1 // pred_check
      _
    $region15: #{tpu_custom_call.1} parent=1 // pred_check_branch
      %43 = sbr.rel (0) target = $region17
    $region16: #{tpu_custom_call.1} parent=1 // pred_region
      %44 = dma.done [#allocation7], 16
    $region17: #{tpu_custom_call.1} parent=1 // pred_fallthru
      _
    // Predicated region
    $region18: #{tpu_custom_call.1} parent=1 // pred_check
      _
    $region19: #{tpu_custom_call.1} parent=1 // pred_check_branch
      %46 = sbr.rel (0) target = $region21
    $region20: #{tpu_custom_call.1} parent=1 // pred_region
      %47 = dma.done [#allocation5], 32
    $region21: #{tpu_custom_call.1} parent=1 // pred_fallthru
      _
    // Predicated region
    $region22: #{tpu_custom_call.1} parent=1 // pred_check
      _
    $region23: #{tpu_custom_call.1} parent=1 // pred_check_branch
      %49 = sbr.rel (0) target = $region25
    $region24: #{tpu_custom_call.1} parent=1 // pred_region
      %50 = dma.done [#allocation10], 256
    $region25: #{tpu_custom_call.1} parent=1 // pred_fallthru
      _
    %51 = sfence
    %v52 = vld [vmem:[#allocation9] sm:$0xff]
    %v53 = vld [vmem:[#allocation9 + $0x8] sm:$0xff]
    %v56 = vcombine.high %v52, %v52
    %v57 = vcombine.high %v53, %v53
    %vm60 = vcmask 1043456
    %v61 = vsel %vm60, %v52, 0.0
    %v62 = vrot.slane %v61, 4
    %v63 = vadd.f32 %v61, %v62
    %v64 = vrot.slane %v63, 2
    %v65 = vadd.f32 %v63, %v64
    %v66 = vrot.slane %v65, 1
    %v67 = vadd.f32 %v65, %v66
    %v68 = vsel %vm60, %v56, 0.0
    %v69 = vrot.slane %v68, 4
    %v70 = vadd.f32 %v68, %v69
    %v71 = vrot.slane %v70, 2
    %v72 = vadd.f32 %v70, %v71
    %v73 = vrot.slane %v72, 1
    %v74 = vadd.f32 %v72, %v73
    %v75 = vsel %vm60, %v53, 0.0
    %v76 = vrot.slane %v75, 4
    %v77 = vadd.f32 %v75, %v76
    %v78 = vrot.slane %v77, 2
    %v79 = vadd.f32 %v77, %v78
    %v80 = vrot.slane %v79, 1
    %v81 = vadd.f32 %v79, %v80
    %v82 = vsel %vm60, %v57, 0.0
    %v83 = vrot.slane %v82, 4
    %v84 = vadd.f32 %v82, %v83
    %v85 = vrot.slane %v84, 2
    %v86 = vadd.f32 %v84, %v85
    %v87 = vrot.slane %v86, 1
    %v88 = vadd.f32 %v86, %v87
    %v89 = vmul.f32 %v67, 0.25
    %v90 = vmul.f32 %v74, 0.25
    %v91 = vmul.f32 %v81, 0.25
    %v92 = vmul.f32 %v88, 0.25
    %v93 = vsel %vm60, %v52, -inf
    %v94 = vrot.slane %v93, 4
    %v95 = vmax.f32 %v93, %v94
    %v96 = vrot.slane %v95, 2
    %v97 = vmax.f32 %v95, %v96
    %v98 = vrot.slane %v97, 1
    %v99 = vmax.f32 %v97, %v98
    %v100 = vsel %vm60, %v56, -inf
    %v101 = vrot.slane %v100, 4
    %v102 = vmax.f32 %v100, %v101
    %v103 = vrot.slane %v102, 2
    %v104 = vmax.f32 %v102, %v103
    %v105 = vrot.slane %v104, 1
    %v106 = vmax.f32 %v104, %v105
    %v107 = vsel %vm60, %v53, -inf
    %v108 = vrot.slane %v107, 4
    %v109 = vmax.f32 %v107, %v108
    %v110 = vrot.slane %v109, 2
    %v111 = vmax.f32 %v109, %v110
    %v112 = vrot.slane %v111, 1
    %v113 = vmax.f32 %v111, %v112
    %v114 = vsel %vm60, %v57, -inf
    %v115 = vrot.slane %v114, 4
    %v116 = vmax.f32 %v114, %v115
    %v117 = vrot.slane %v116, 2
    %v118 = vmax.f32 %v116, %v117
    %v119 = vrot.slane %v118, 1
    %v120 = vmax.f32 %v118, %v119
    %vm121 = vcmask 410624
    %122 = vst.msk [vmem:[#allocation2] sm:$0x3] %vm121, 0.0
    %vm123 = vcmask 828824
    %124 = vst.msk [vmem:[#allocation2 + $0x4] sm:$0x3] %vm123, 0.0
    %v129 = vcombine.low %v89, %v90
    %v131 = vunpack.c.l.s4 1983009808
    %v132 = vunpack.c.0.s8 %v131
    %v133 = vlaneseq
    %v134 = vshrl.u32 %v133, 7
    %v135 = vsub.s32 %v132, %v134
    %v136 = vrot.slane %v129, %v135
    %v137 = vcombine.low %v91, %v92
    %v139 = vunpack.c.l.s4 1983009808
    %v140 = vunpack.c.0.s8 %v139
    %v141 = vlaneseq
    %v142 = vshrl.u32 %v141, 7
    %v143 = vsub.s32 %v140, %v142
    %v144 = vrot.slane %v137, %v143
    %vm145 = vcmask 1044484
    %v146 = vsel %vm145, %v136, %v136
    %vm147 = vcmask 1046534
    %v148 = vsel %vm147, %v136, %v146
    %v149 = vrot.slane %v144, 7
    %vm150 = vcmask 1041409
    %v151 = vsel %vm150, %v149, %v148
    %vm152 = vcmask 1043459
    %v153 = vsel %vm152, %v149, %v151
    %vm154 = vcmask 1045509
    %v155 = vsel %vm154, %v149, %v153
    %vm156 = vcmask 1047559
    %v157 = vsel %vm156, %v149, %v155
    %158 = vrot.lane.b32.xlu0 %v157, 51
    %v159 = vpop.permute.xlu0 %158
    %v160 = vrot.slane %v159, 6
    %vm161 = vcmask 416768
    %v162 = vsel %vm161, %v160, %v159
    %vm164 = vcmask 1041816
    %vm165 = vcmask 1043458
    %vm166 = vmor %vm165, %vm164
    %vm167 = vcmask 414724
    %vm168 = vmor %vm167, %vm166
    %169 = vst.msk [vmem:[#allocation2] sm:$0x3f] %vm168, %v162
    %170 = vst.msk [vmem:[#allocation3] sm:$0x3] %vm121, 0.0
    %171 = vst.msk [vmem:[#allocation3 + $0x4] sm:$0x3] %vm123, 0.0
    %v176 = vcombine.low %v99, %v106
    %v178 = vunpack.c.l.s4 1983009808
    %v179 = vunpack.c.0.s8 %v178
    %v180 = vlaneseq
    %v181 = vshrl.u32 %v180, 7
    %v182 = vsub.s32 %v179, %v181
    %v183 = vrot.slane %v176, %v182
    %v184 = vcombine.low %v113, %v120
    %v186 = vunpack.c.l.s4 1983009808
    %v187 = vunpack.c.0.s8 %v186
    %v188 = vlaneseq
    %v189 = vshrl.u32 %v188, 7
    %v190 = vsub.s32 %v187, %v189
    %v191 = vrot.slane %v184, %v190
    %v192 = vsel %vm145, %v183, %v183
    %v193 = vsel %vm147, %v183, %v192
    %v194 = vrot.slane %v191, 7
    %v195 = vsel %vm150, %v194, %v193
    %v196 = vsel %vm152, %v194, %v195
    %v197 = vsel %vm154, %v194, %v196
    %v198 = vsel %vm156, %v194, %v197
    %199 = vrot.lane.b32.xlu0 %v198, 51
    %v200 = vpop.permute.xlu0 %199
    %v201 = vrot.slane %v200, 6
    %v202 = vsel %vm161, %v201, %v200
    %204 = vst.msk [vmem:[#allocation3] sm:$0x3f] %vm168, %v202
    %v205 = vld [vmem:[#allocation8] sm:$0x3]
    %v206 = vadd.s32 %v205, 4294967293
    %vm207 = vcmp.ge.s32.totalorder %v206, 0
    %vm208 = vcmp.lt.s32.totalorder %v206, 16
    %vm209 = vmand %vm207, %vm208
    %v210 = vadd.s32 %v205, 4294967294
    %vm211 = vcmp.ge.s32.totalorder %v210, 0
    %vm212 = vcmp.lt.s32.totalorder %v210, 16
    %vm213 = vmand %vm211, %vm212
    %v214 = vadd.s32 %v205, 4294967295
    %vm215 = vcmp.ge.s32.totalorder %v214, 0
    %vm216 = vcmp.lt.s32.totalorder %v214, 16
    %vm217 = vmand %vm215, %vm216
    %v218 = vadd.s32 %v205, 1
    %vm219 = vcmp.ge.s32.totalorder %v218, 0
    %vm220 = vcmp.lt.s32.totalorder %v218, 16
    %vm221 = vmand %vm219, %vm220
    %v222 = vadd.s32 %v205, 2
    %vm223 = vcmp.ge.s32.totalorder %v222, 0
    %vm224 = vcmp.lt.s32.totalorder %v222, 16
    %vm225 = vmand %vm223, %vm224
    %v226 = vadd.s32 %v205, 3
    %vm227 = vcmp.ge.s32.totalorder %v226, 0
    %vm228 = vcmp.lt.s32.totalorder %v226, 16
    %vm229 = vmand %vm227, %vm228
    %v230 = vld [vmem:[#allocation2] sm:$0x3f]
    %s231 = sld [smem:[#allocation4]]
    %v232 = vstv %s231
    %v233 = vmul.f32 %v230, %v232
    %s234 = sld [smem:[#allocation4 + $0x1]]
    %v235 = vstv %s234
    %v236 = vmul.f32 %v230, %v235
    %s237 = sld [smem:[#allocation4 + $0x2]]
    %v238 = vstv %s237
    %v239 = vmul.f32 %v230, %v238
    %s240 = sld [smem:[#allocation4 + $0x3]]
    %v241 = vstv %s240
    %v242 = vmul.f32 %v230, %v241
    %s243 = sld [smem:[#allocation4 + $0x4]]
    %v244 = vstv %s243
    %v245 = vmul.f32 %v230, %v244
    %s246 = sld [smem:[#allocation4 + $0x5]]
    %v247 = vstv %s246
    %v248 = vmul.f32 %v230, %v247
    %s249 = sld [smem:[#allocation4 + $0x6]]
    %v250 = vstv %s249
    %v251 = vmul.f32 %v230, %v250
    %s252 = sld [smem:[#allocation4 + $0x7]]
    %v253 = vstv %s252
    %v254 = vmul.f32 %v230, %v253
    %256 = vrot.lane.b32.xlu0 %v254, 112
    %v257 = vpop.permute.xlu0 %256
    %v258 = vrot.slane %v257, 2
    %vm259 = vcmask 916480
    %v260 = vsel %vm259, %v257, %v258
    %v262 = vadd.f32 %v233, %v260
    %s263 = sld [smem:[#allocation4 + $0x8]]
    %v264 = vstv %s263
    %v265 = vmul.f32 %v230, %v264
    %267 = vrot.lane.b32.xlu0 %v265, 112
    %v268 = vpop.permute.xlu0 %267
    %v269 = vrot.slane %v268, 2
    %v270 = vsel %vm259, %v268, %v269
    %v272 = vadd.f32 %v236, %v270
    %s273 = sld [smem:[#allocation4 + $0x9]]
    %v274 = vstv %s273
    %v275 = vmul.f32 %v230, %v274
    %277 = vrot.lane.b32.xlu0 %v275, 112
    %v278 = vpop.permute.xlu0 %277
    %v279 = vrot.slane %v278, 2
    %v280 = vsel %vm259, %v278, %v279
    %v282 = vadd.f32 %v239, %v280
    %s283 = sld [smem:[#allocation4 + $0xa]]
    %v284 = vstv %s283
    %v285 = vmul.f32 %v230, %v284
    %287 = vrot.lane.b32.xlu0 %v285, 112
    %v288 = vpop.permute.xlu0 %287
    %v289 = vrot.slane %v288, 2
    %v290 = vsel %vm259, %v288, %v289
    %v292 = vadd.f32 %v242, %v290
    %s293 = sld [smem:[#allocation4 + $0xb]]
    %v294 = vstv %s293
    %v295 = vmul.f32 %v230, %v294
    %297 = vrot.lane.b32.xlu0 %v295, 112
    %v298 = vpop.permute.xlu0 %297
    %v299 = vrot.slane %v298, 2
    %v300 = vsel %vm259, %v298, %v299
    %v302 = vadd.f32 %v245, %v300
    %s303 = sld [smem:[#allocation4 + $0xc]]
    %v304 = vstv %s303
    %v305 = vmul.f32 %v230, %v304
    %307 = vrot.lane.b32.xlu0 %v305, 112
    %v308 = vpop.permute.xlu0 %307
    %v309 = vrot.slane %v308, 2
    %v310 = vsel %vm259, %v308, %v309
    %v312 = vadd.f32 %v248, %v310
    %s313 = sld [smem:[#allocation4 + $0xd]]
    %v314 = vstv %s313
    %v315 = vmul.f32 %v230, %v314
    %317 = vrot.lane.b32.xlu0 %v315, 112
    %v318 = vpop.permute.xlu0 %317
    %v319 = vrot.slane %v318, 2
    %v320 = vsel %vm259, %v318, %v319
    %v322 = vadd.f32 %v251, %v320
    %s323 = sld [smem:[#allocation4 + $0xe]]
    %v324 = vstv %s323
    %v325 = vmul.f32 %v230, %v324
    %327 = vrot.lane.b32.xlu0 %v325, 96
    %v328 = vpop.permute.xlu0 %327
    %v329 = vrot.slane %v328, 2
    %vm330 = vcmask 785408
    %v331 = vsel %vm330, %v328, %v329
    %v333 = vadd.f32 %v262, %v331
    %s334 = sld [smem:[#allocation4 + $0xf]]
    %v335 = vstv %s334
    %v336 = vmul.f32 %v230, %v335
    %338 = vrot.lane.b32.xlu0 %v336, 96
    %v339 = vpop.permute.xlu0 %338
    %v340 = vrot.slane %v339, 2
    %v341 = vsel %vm330, %v339, %v340
    %v343 = vadd.f32 %v272, %v341
    %s344 = sld [smem:[#allocation4 + $0x10]]
    %v345 = vstv %s344
    %v346 = vmul.f32 %v230, %v345
    %348 = vrot.lane.b32.xlu0 %v346, 96
    %v349 = vpop.permute.xlu0 %348
    %v350 = vrot.slane %v349, 2
    %v351 = vsel %vm330, %v349, %v350
    %v353 = vadd.f32 %v282, %v351
    %s354 = sld [smem:[#allocation4 + $0x11]]
    %v355 = vstv %s354
    %v356 = vmul.f32 %v230, %v355
    %358 = vrot.lane.b32.xlu0 %v356, 96
    %v359 = vpop.permute.xlu0 %358
    %v360 = vrot.slane %v359, 2
    %v361 = vsel %vm330, %v359, %v360
    %v363 = vadd.f32 %v292, %v361
    %s364 = sld [smem:[#allocation4 + $0x12]]
    %v365 = vstv %s364
    %v366 = vmul.f32 %v230, %v365
    %368 = vrot.lane.b32.xlu0 %v366, 96
    %v369 = vpop.permute.xlu0 %368
    %v370 = vrot.slane %v369, 2
    %v371 = vsel %vm330, %v369, %v370
    %v373 = vadd.f32 %v302, %v371
    %s374 = sld [smem:[#allocation4 + $0x13]]
    %v375 = vstv %s374
    %v376 = vmul.f32 %v230, %v375
    %378 = vrot.lane.b32.xlu0 %v376, 96
    %v379 = vpop.permute.xlu0 %378
    %v380 = vrot.slane %v379, 2
    %v381 = vsel %vm330, %v379, %v380
    %v383 = vadd.f32 %v312, %v381
    %s384 = sld [smem:[#allocation4 + $0x14]]
    %v385 = vstv %s384
    %v386 = vmul.f32 %v230, %v385
    %388 = vrot.lane.b32.xlu0 %v386, 96
    %v389 = vpop.permute.xlu0 %388
    %v390 = vrot.slane %v389, 2
    %v391 = vsel %vm330, %v389, %v390
    %v393 = vadd.f32 %v322, %v391
    %s394 = sld [smem:[#allocation4 + $0x15]]
    %v395 = vstv %s394
    %v396 = vmul.f32 %v230, %v395
    %398 = vrot.lane.b32.xlu0 %v396, 80
    %v399 = vpop.permute.xlu0 %398
    %v400 = vrot.slane %v399, 2
    %vm401 = vcmask 654336
    %v402 = vsel %vm401, %v399, %v400
    %v404 = vadd.f32 %v333, %v402
    %s405 = sld [smem:[#allocation4 + $0x16]]
    %v406 = vstv %s405
    %v407 = vmul.f32 %v230, %v406
    %409 = vrot.lane.b32.xlu0 %v407, 80
    %v410 = vpop.permute.xlu0 %409
    %v411 = vrot.slane %v410, 2
    %v412 = vsel %vm401, %v410, %v411
    %v414 = vadd.f32 %v343, %v412
    %s415 = sld [smem:[#allocation4 + $0x17]]
    %v416 = vstv %s415
    %v417 = vmul.f32 %v230, %v416
    %419 = vrot.lane.b32.xlu0 %v417, 80
    %v420 = vpop.permute.xlu0 %419
    %v421 = vrot.slane %v420, 2
    %v422 = vsel %vm401, %v420, %v421
    %v424 = vadd.f32 %v353, %v422
    %s425 = sld [smem:[#allocation4 + $0x18]]
    %v426 = vstv %s425
    %v427 = vmul.f32 %v230, %v426
    %429 = vrot.lane.b32.xlu0 %v427, 80
    %v430 = vpop.permute.xlu0 %429
    %v431 = vrot.slane %v430, 2
    %v432 = vsel %vm401, %v430, %v431
    %v434 = vadd.f32 %v363, %v432
    %s435 = sld [smem:[#allocation4 + $0x19]]
    %v436 = vstv %s435
    %v437 = vmul.f32 %v230, %v436
    %439 = vrot.lane.b32.xlu0 %v437, 80
    %v440 = vpop.permute.xlu0 %439
    %v441 = vrot.slane %v440, 2
    %v442 = vsel %vm401, %v440, %v441
    %v444 = vadd.f32 %v373, %v442
    %s445 = sld [smem:[#allocation4 + $0x1a]]
    %v446 = vstv %s445
    %v447 = vmul.f32 %v230, %v446
    %449 = vrot.lane.b32.xlu0 %v447, 80
    %v450 = vpop.permute.xlu0 %449
    %v451 = vrot.slane %v450, 2
    %v452 = vsel %vm401, %v450, %v451
    %v454 = vadd.f32 %v383, %v452
    %s455 = sld [smem:[#allocation4 + $0x1b]]
    %v456 = vstv %s455
    %v457 = vmul.f32 %v230, %v456
    %459 = vrot.lane.b32.xlu0 %v457, 80
    %v460 = vpop.permute.xlu0 %459
    %v461 = vrot.slane %v460, 2
    %v462 = vsel %vm401, %v460, %v461
    %v464 = vadd.f32 %v393, %v462
    %s465 = sld [smem:[#allocation4 + $0x1c]]
    %v466 = vstv %s465
    %v467 = vmul.f32 %v230, %v466
    %469 = vrot.lane.b32.xlu0 %v467, 64
    %v470 = vpop.permute.xlu0 %469
    %v471 = vrot.slane %v470, 2
    %vm472 = vcmask 523264
    %v473 = vsel %vm472, %v470, %v471
    %v475 = vadd.f32 %v404, %v473
    %s476 = sld [smem:[#allocation4 + $0x1d]]
    %v477 = vstv %s476
    %v478 = vmul.f32 %v230, %v477
    %480 = vrot.lane.b32.xlu0 %v478, 64
    %v481 = vpop.permute.xlu0 %480
    %v482 = vrot.slane %v481, 2
    %v483 = vsel %vm472, %v481, %v482
    %v485 = vadd.f32 %v414, %v483
    %s486 = sld [smem:[#allocation4 + $0x1e]]
    %v487 = vstv %s486
    %v488 = vmul.f32 %v230, %v487
    %490 = vrot.lane.b32.xlu0 %v488, 64
    %v491 = vpop.permute.xlu0 %490
    %v492 = vrot.slane %v491, 2
    %v493 = vsel %vm472, %v491, %v492
    %v495 = vadd.f32 %v424, %v493
    %s496 = sld [smem:[#allocation4 + $0x1f]]
    %v497 = vstv %s496
    %v498 = vmul.f32 %v230, %v497
    %500 = vrot.lane.b32.xlu0 %v498, 64
    %v501 = vpop.permute.xlu0 %500
    %v502 = vrot.slane %v501, 2
    %v503 = vsel %vm472, %v501, %v502
    %v505 = vadd.f32 %v434, %v503
    %s506 = sld [smem:[#allocation4 + $0x20]]
    %v507 = vstv %s506
    %v508 = vmul.f32 %v230, %v507
    %510 = vrot.lane.b32.xlu0 %v508, 64
    %v511 = vpop.permute.xlu0 %510
    %v512 = vrot.slane %v511, 2
    %v513 = vsel %vm472, %v511, %v512
    %v515 = vadd.f32 %v444, %v513
    %s516 = sld [smem:[#allocation4 + $0x21]]
    %v517 = vstv %s516
    %v518 = vmul.f32 %v230, %v517
    %520 = vrot.lane.b32.xlu0 %v518, 64
    %v521 = vpop.permute.xlu0 %520
    %v522 = vrot.slane %v521, 2
    %v523 = vsel %vm472, %v521, %v522
    %v525 = vadd.f32 %v454, %v523
    %s526 = sld [smem:[#allocation4 + $0x22]]
    %v527 = vstv %s526
    %v528 = vmul.f32 %v230, %v527
    %530 = vrot.lane.b32.xlu0 %v528, 64
    %v531 = vpop.permute.xlu0 %530
    %v532 = vrot.slane %v531, 2
    %v533 = vsel %vm472, %v531, %v532
    %v535 = vadd.f32 %v464, %v533
    %s536 = sld [smem:[#allocation4 + $0x23]]
    %v537 = vstv %s536
    %v538 = vmul.f32 %v230, %v537
    %540 = vrot.lane.b32.xlu0 %v538, 48
    %v541 = vpop.permute.xlu0 %540
    %v542 = vrot.slane %v541, 2
    %vm543 = vcmask 392192
    %v544 = vsel %vm543, %v541, %v542
    %v546 = vadd.f32 %v475, %v544
    %s547 = sld [smem:[#allocation4 + $0x24]]
    %v548 = vstv %s547
    %v549 = vmul.f32 %v230, %v548
    %551 = vrot.lane.b32.xlu0 %v549, 48
    %v552 = vpop.permute.xlu0 %551
    %v553 = vrot.slane %v552, 2
    %v554 = vsel %vm543, %v552, %v553
    %v556 = vadd.f32 %v485, %v554
    %s557 = sld [smem:[#allocation4 + $0x25]]
    %v558 = vstv %s557
    %v559 = vmul.f32 %v230, %v558
    %561 = vrot.lane.b32.xlu0 %v559, 48
    %v562 = vpop.permute.xlu0 %561
    %v563 = vrot.slane %v562, 2
    %v564 = vsel %vm543, %v562, %v563
    %v566 = vadd.f32 %v495, %v564
    %s567 = sld [smem:[#allocation4 + $0x26]]
    %v568 = vstv %s567
    %v569 = vmul.f32 %v230, %v568
    %571 = vrot.lane.b32.xlu0 %v569, 48
    %v572 = vpop.permute.xlu0 %571
    %v573 = vrot.slane %v572, 2
    %v574 = vsel %vm543, %v572, %v573
    %v576 = vadd.f32 %v505, %v574
    %s577 = sld [smem:[#allocation4 + $0x27]]
    %v578 = vstv %s577
    %v579 = vmul.f32 %v230, %v578
    %581 = vrot.lane.b32.xlu0 %v579, 48
    %v582 = vpop.permute.xlu0 %581
    %v583 = vrot.slane %v582, 2
    %v584 = vsel %vm543, %v582, %v583
    %v586 = vadd.f32 %v515, %v584
    %s587 = sld [smem:[#allocation4 + $0x28]]
    %v588 = vstv %s587
    %v589 = vmul.f32 %v230, %v588
    %591 = vrot.lane.b32.xlu0 %v589, 48
    %v592 = vpop.permute.xlu0 %591
    %v593 = vrot.slane %v592, 2
    %v594 = vsel %vm543, %v592, %v593
    %v596 = vadd.f32 %v525, %v594
    %s597 = sld [smem:[#allocation4 + $0x29]]
    %v598 = vstv %s597
    %v599 = vmul.f32 %v230, %v598
    %601 = vrot.lane.b32.xlu0 %v599, 48
    %v602 = vpop.permute.xlu0 %601
    %v603 = vrot.slane %v602, 2
    %v604 = vsel %vm543, %v602, %v603
    %v606 = vadd.f32 %v535, %v604
    %s607 = sld [smem:[#allocation4 + $0x2a]]
    %v608 = vstv %s607
    %v609 = vmul.f32 %v230, %v608
    %611 = vrot.lane.b32.xlu0 %v609, 32
    %v612 = vpop.permute.xlu0 %611
    %v613 = vrot.slane %v612, 2
    %vm614 = vcmask 261120
    %v615 = vsel %vm614, %v612, %v613
    %v617 = vadd.f32 %v546, %v615
    %s618 = sld [smem:[#allocation4 + $0x2b]]
    %v619 = vstv %s618
    %v620 = vmul.f32 %v230, %v619
    %622 = vrot.lane.b32.xlu0 %v620, 32
    %v623 = vpop.permute.xlu0 %622
    %v624 = vrot.slane %v623, 2
    %v625 = vsel %vm614, %v623, %v624
    %v627 = vadd.f32 %v556, %v625
    %s628 = sld [smem:[#allocation4 + $0x2c]]
    %v629 = vstv %s628
    %v630 = vmul.f32 %v230, %v629
    %632 = vrot.lane.b32.xlu0 %v630, 32
    %v633 = vpop.permute.xlu0 %632
    %v634 = vrot.slane %v633, 2
    %v635 = vsel %vm614, %v633, %v634
    %v637 = vadd.f32 %v566, %v635
    %s638 = sld [smem:[#allocation4 + $0x2d]]
    %v639 = vstv %s638
    %v640 = vmul.f32 %v230, %v639
    %642 = vrot.lane.b32.xlu0 %v640, 32
    %v643 = vpop.permute.xlu0 %642
    %v644 = vrot.slane %v643, 2
    %v645 = vsel %vm614, %v643, %v644
    %v647 = vadd.f32 %v576, %v645
    %s648 = sld [smem:[#allocation4 + $0x2e]]
    %v649 = vstv %s648
    %v650 = vmul.f32 %v230, %v649
    %652 = vrot.lane.b32.xlu0 %v650, 32
    %v653 = vpop.permute.xlu0 %652
    %v654 = vrot.slane %v653, 2
    %v655 = vsel %vm614, %v653, %v654
    %v657 = vadd.f32 %v586, %v655
    %s658 = sld [smem:[#allocation4 + $0x2f]]
    %v659 = vstv %s658
    %v660 = vmul.f32 %v230, %v659
    %662 = vrot.lane.b32.xlu0 %v660, 32
    %v663 = vpop.permute.xlu0 %662
    %v664 = vrot.slane %v663, 2
    %v665 = vsel %vm614, %v663, %v664
    %v667 = vadd.f32 %v596, %v665
    %s668 = sld [smem:[#allocation4 + $0x30]]
    %v669 = vstv %s668
    %v670 = vmul.f32 %v230, %v669
    %672 = vrot.lane.b32.xlu0 %v670, 32
    %v673 = vpop.permute.xlu0 %672
    %v674 = vrot.slane %v673, 2
    %v675 = vsel %vm614, %v673, %v674
    %v677 = vadd.f32 %v606, %v675
    %v678 = vld [vmem:[#allocation3] sm:$0x3f]
    %s679 = sld [smem:[#allocation4 + $0x31]]
    %v680 = vstv %s679
    %v681 = vmul.f32 %v678, %v680
    %v682 = vadd.f32 %v617, %v681
    %s683 = sld [smem:[#allocation4 + $0x32]]
    %v684 = vstv %s683
    %v685 = vmul.f32 %v678, %v684
    %v686 = vadd.f32 %v627, %v685
    %s687 = sld [smem:[#allocation4 + $0x33]]
    %v688 = vstv %s687
    %v689 = vmul.f32 %v678, %v688
    %v690 = vadd.f32 %v637, %v689
    %s691 = sld [smem:[#allocation4 + $0x34]]
    %v692 = vstv %s691
    %v693 = vmul.f32 %v678, %v692
    %v694 = vadd.f32 %v647, %v693
    %s695 = sld [smem:[#allocation4 + $0x35]]
    %v696 = vstv %s695
    %v697 = vmul.f32 %v678, %v696
    %v698 = vadd.f32 %v657, %v697
    %s699 = sld [smem:[#allocation4 + $0x36]]
    %v700 = vstv %s699
    %v701 = vmul.f32 %v678, %v700
    %v702 = vadd.f32 %v667, %v701
    %s703 = sld [smem:[#allocation4 + $0x37]]
    %v704 = vstv %s703
    %v705 = vmul.f32 %v678, %v704
    %v706 = vadd.f32 %v677, %v705
    %s707 = sld [smem:[#allocation4 + $0x38]]
    %v708 = vstv %s707
    %v709 = vmul.f32 %v678, %v708
    %711 = vrot.lane.b32.xlu0 %v709, 112
    %v712 = vpop.permute.xlu0 %711
    %v713 = vrot.slane %v712, 2
    %v714 = vsel %vm259, %v712, %v713
    %v716 = vadd.f32 %v682, %v714
    %s717 = sld [smem:[#allocation4 + $0x39]]
    %v718 = vstv %s717
    %v719 = vmul.f32 %v678, %v718
    %721 = vrot.lane.b32.xlu0 %v719, 112
    %v722 = vpop.permute.xlu0 %721
    %v723 = vrot.slane %v722, 2
    %v724 = vsel %vm259, %v722, %v723
    %v726 = vadd.f32 %v686, %v724
    %s727 = sld [smem:[#allocation4 + $0x3a]]
    %v728 = vstv %s727
    %v729 = vmul.f32 %v678, %v728
    %731 = vrot.lane.b32.xlu0 %v729, 112
    %v732 = vpop.permute.xlu0 %731
    %v733 = vrot.slane %v732, 2
    %v734 = vsel %vm259, %v732, %v733
    %v736 = vadd.f32 %v690, %v734
    %s737 = sld [smem:[#allocation4 + $0x3b]]
    %v738 = vstv %s737
    %v739 = vmul.f32 %v678, %v738
    %741 = vrot.lane.b32.xlu0 %v739, 112
    %v742 = vpop.permute.xlu0 %741
    %v743 = vrot.slane %v742, 2
    %v744 = vsel %vm259, %v742, %v743
    %v746 = vadd.f32 %v694, %v744
    %s747 = sld [smem:[#allocation4 + $0x3c]]
    %v748 = vstv %s747
    %v749 = vmul.f32 %v678, %v748
    %751 = vrot.lane.b32.xlu0 %v749, 112
    %v752 = vpop.permute.xlu0 %751
    %v753 = vrot.slane %v752, 2
    %v754 = vsel %vm259, %v752, %v753
    %v756 = vadd.f32 %v698, %v754
    %s757 = sld [smem:[#allocation4 + $0x3d]]
    %v758 = vstv %s757
    %v759 = vmul.f32 %v678, %v758
    %761 = vrot.lane.b32.xlu0 %v759, 112
    %v762 = vpop.permute.xlu0 %761
    %v763 = vrot.slane %v762, 2
    %v764 = vsel %vm259, %v762, %v763
    %v766 = vadd.f32 %v702, %v764
    %s767 = sld [smem:[#allocation4 + $0x3e]]
    %v768 = vstv %s767
    %v769 = vmul.f32 %v678, %v768
    %771 = vrot.lane.b32.xlu0 %v769, 112
    %v772 = vpop.permute.xlu0 %771
    %v773 = vrot.slane %v772, 2
    %v774 = vsel %vm259, %v772, %v773
    %v776 = vadd.f32 %v706, %v774
    %s777 = sld [smem:[#allocation4 + $0x3f]]
    %v778 = vstv %s777
    %v779 = vmul.f32 %v678, %v778
    %781 = vrot.lane.b32.xlu0 %v779, 96
    %v782 = vpop.permute.xlu0 %781
    %v783 = vrot.slane %v782, 2
    %v784 = vsel %vm330, %v782, %v783
    %v786 = vadd.f32 %v716, %v784
    %s787 = sld [smem:[#allocation4 + $0x40]]
    %v788 = vstv %s787
    %v789 = vmul.f32 %v678, %v788
    %791 = vrot.lane.b32.xlu0 %v789, 96
    %v792 = vpop.permute.xlu0 %791
    %v793 = vrot.slane %v792, 2
    %v794 = vsel %vm330, %v792, %v793
    %v796 = vadd.f32 %v726, %v794
    %s797 = sld [smem:[#allocation4 + $0x41]]
    %v798 = vstv %s797
    %v799 = vmul.f32 %v678, %v798
    %801 = vrot.lane.b32.xlu0 %v799, 96
    %v802 = vpop.permute.xlu0 %801
    %v803 = vrot.slane %v802, 2
    %v804 = vsel %vm330, %v802, %v803
    %v806 = vadd.f32 %v736, %v804
    %s807 = sld [smem:[#allocation4 + $0x42]]
    %v808 = vstv %s807
    %v809 = vmul.f32 %v678, %v808
    %811 = vrot.lane.b32.xlu0 %v809, 96
    %v812 = vpop.permute.xlu0 %811
    %v813 = vrot.slane %v812, 2
    %v814 = vsel %vm330, %v812, %v813
    %v816 = vadd.f32 %v746, %v814
    %s817 = sld [smem:[#allocation4 + $0x43]]
    %v818 = vstv %s817
    %v819 = vmul.f32 %v678, %v818
    %821 = vrot.lane.b32.xlu0 %v819, 96
    %v822 = vpop.permute.xlu0 %821
    %v823 = vrot.slane %v822, 2
    %v824 = vsel %vm330, %v822, %v823
    %v826 = vadd.f32 %v756, %v824
    %s827 = sld [smem:[#allocation4 + $0x44]]
    %v828 = vstv %s827
    %v829 = vmul.f32 %v678, %v828
    %831 = vrot.lane.b32.xlu0 %v829, 96
    %v832 = vpop.permute.xlu0 %831
    %v833 = vrot.slane %v832, 2
    %v834 = vsel %vm330, %v832, %v833
    %v836 = vadd.f32 %v766, %v834
    %s837 = sld [smem:[#allocation4 + $0x45]]
    %v838 = vstv %s837
    %v839 = vmul.f32 %v678, %v838
    %841 = vrot.lane.b32.xlu0 %v839, 96
    %v842 = vpop.permute.xlu0 %841
    %v843 = vrot.slane %v842, 2
    %v844 = vsel %vm330, %v842, %v843
    %v846 = vadd.f32 %v776, %v844
    %s847 = sld [smem:[#allocation4 + $0x46]]
    %v848 = vstv %s847
    %v849 = vmul.f32 %v678, %v848
    %851 = vrot.lane.b32.xlu0 %v849, 80
    %v852 = vpop.permute.xlu0 %851
    %v853 = vrot.slane %v852, 2
    %v854 = vsel %vm401, %v852, %v853
    %v856 = vadd.f32 %v786, %v854
    %s857 = sld [smem:[#allocation4 + $0x47]]
    %v858 = vstv %s857
    %v859 = vmul.f32 %v678, %v858
    %861 = vrot.lane.b32.xlu0 %v859, 80
    %v862 = vpop.permute.xlu0 %861
    %v863 = vrot.slane %v862, 2
    %v864 = vsel %vm401, %v862, %v863
    %v866 = vadd.f32 %v796, %v864
    %s867 = sld [smem:[#allocation4 + $0x48]]
    %v868 = vstv %s867
    %v869 = vmul.f32 %v678, %v868
    %871 = vrot.lane.b32.xlu0 %v869, 80
    %v872 = vpop.permute.xlu0 %871
    %v873 = vrot.slane %v872, 2
    %v874 = vsel %vm401, %v872, %v873
    %v876 = vadd.f32 %v806, %v874
    %s877 = sld [smem:[#allocation4 + $0x49]]
    %v878 = vstv %s877
    %v879 = vmul.f32 %v678, %v878
    %881 = vrot.lane.b32.xlu0 %v879, 80
    %v882 = vpop.permute.xlu0 %881
    %v883 = vrot.slane %v882, 2
    %v884 = vsel %vm401, %v882, %v883
    %v886 = vadd.f32 %v816, %v884
    %s887 = sld [smem:[#allocation4 + $0x4a]]
    %v888 = vstv %s887
    %v889 = vmul.f32 %v678, %v888
    %891 = vrot.lane.b32.xlu0 %v889, 80
    %v892 = vpop.permute.xlu0 %891
    %v893 = vrot.slane %v892, 2
    %v894 = vsel %vm401, %v892, %v893
    %v896 = vadd.f32 %v826, %v894
    %s897 = sld [smem:[#allocation4 + $0x4b]]
    %v898 = vstv %s897
    %v899 = vmul.f32 %v678, %v898
    %901 = vrot.lane.b32.xlu0 %v899, 80
    %v902 = vpop.permute.xlu0 %901
    %v903 = vrot.slane %v902, 2
    %v904 = vsel %vm401, %v902, %v903
    %v906 = vadd.f32 %v836, %v904
    %s907 = sld [smem:[#allocation4 + $0x4c]]
    %v908 = vstv %s907
    %v909 = vmul.f32 %v678, %v908
    %911 = vrot.lane.b32.xlu0 %v909, 80
    %v912 = vpop.permute.xlu0 %911
    %v913 = vrot.slane %v912, 2
    %v914 = vsel %vm401, %v912, %v913
    %v916 = vadd.f32 %v846, %v914
    %s917 = sld [smem:[#allocation4 + $0x4d]]
    %v918 = vstv %s917
    %v919 = vmul.f32 %v678, %v918
    %921 = vrot.lane.b32.xlu0 %v919, 64
    %v922 = vpop.permute.xlu0 %921
    %v923 = vrot.slane %v922, 2
    %v924 = vsel %vm472, %v922, %v923
    %v926 = vadd.f32 %v856, %v924
    %s927 = sld [smem:[#allocation4 + $0x4e]]
    %v928 = vstv %s927
    %v929 = vmul.f32 %v678, %v928
    %931 = vrot.lane.b32.xlu0 %v929, 64
    %v932 = vpop.permute.xlu0 %931
    %v933 = vrot.slane %v932, 2
    %v934 = vsel %vm472, %v932, %v933
    %v936 = vadd.f32 %v866, %v934
    %s937 = sld [smem:[#allocation4 + $0x4f]]
    %v938 = vstv %s937
    %v939 = vmul.f32 %v678, %v938
    %941 = vrot.lane.b32.xlu0 %v939, 64
    %v942 = vpop.permute.xlu0 %941
    %v943 = vrot.slane %v942, 2
    %v944 = vsel %vm472, %v942, %v943
    %v946 = vadd.f32 %v876, %v944
    %s947 = sld [smem:[#allocation4 + $0x50]]
    %v948 = vstv %s947
    %v949 = vmul.f32 %v678, %v948
    %951 = vrot.lane.b32.xlu0 %v949, 64
    %v952 = vpop.permute.xlu0 %951
    %v953 = vrot.slane %v952, 2
    %v954 = vsel %vm472, %v952, %v953
    %v956 = vadd.f32 %v886, %v954
    %s957 = sld [smem:[#allocation4 + $0x51]]
    %v958 = vstv %s957
    %v959 = vmul.f32 %v678, %v958
    %961 = vrot.lane.b32.xlu0 %v959, 64
    %v962 = vpop.permute.xlu0 %961
    %v963 = vrot.slane %v962, 2
    %v964 = vsel %vm472, %v962, %v963
    %v966 = vadd.f32 %v896, %v964
    %s967 = sld [smem:[#allocation4 + $0x52]]
    %v968 = vstv %s967
    %v969 = vmul.f32 %v678, %v968
    %971 = vrot.lane.b32.xlu0 %v969, 64
    %v972 = vpop.permute.xlu0 %971
    %v973 = vrot.slane %v972, 2
    %v974 = vsel %vm472, %v972, %v973
    %v976 = vadd.f32 %v906, %v974
    %s977 = sld [smem:[#allocation4 + $0x53]]
    %v978 = vstv %s977
    %v979 = vmul.f32 %v678, %v978
    %981 = vrot.lane.b32.xlu0 %v979, 64
    %v982 = vpop.permute.xlu0 %981
    %v983 = vrot.slane %v982, 2
    %v984 = vsel %vm472, %v982, %v983
    %v986 = vadd.f32 %v916, %v984
    %s987 = sld [smem:[#allocation4 + $0x54]]
    %v988 = vstv %s987
    %v989 = vmul.f32 %v678, %v988
    %991 = vrot.lane.b32.xlu0 %v989, 48
    %v992 = vpop.permute.xlu0 %991
    %v993 = vrot.slane %v992, 2
    %v994 = vsel %vm543, %v992, %v993
    %v996 = vadd.f32 %v926, %v994
    %s997 = sld [smem:[#allocation4 + $0x55]]
    %v998 = vstv %s997
    %v999 = vmul.f32 %v678, %v998
    %1001 = vrot.lane.b32.xlu0 %v999, 48
    %v1002 = vpop.permute.xlu0 %1001
    %v1003 = vrot.slane %v1002, 2
    %v1004 = vsel %vm543, %v1002, %v1003
    %v1006 = vadd.f32 %v936, %v1004
    %s1007 = sld [smem:[#allocation4 + $0x56]]
    %v1008 = vstv %s1007
    %v1009 = vmul.f32 %v678, %v1008
    %1011 = vrot.lane.b32.xlu0 %v1009, 48
    %v1012 = vpop.permute.xlu0 %1011
    %v1013 = vrot.slane %v1012, 2
    %v1014 = vsel %vm543, %v1012, %v1013
    %v1016 = vadd.f32 %v946, %v1014
    %s1017 = sld [smem:[#allocation4 + $0x57]]
    %v1018 = vstv %s1017
    %v1019 = vmul.f32 %v678, %v1018
    %1021 = vrot.lane.b32.xlu0 %v1019, 48
    %v1022 = vpop.permute.xlu0 %1021
    %v1023 = vrot.slane %v1022, 2
    %v1024 = vsel %vm543, %v1022, %v1023
    %v1026 = vadd.f32 %v956, %v1024
    %s1027 = sld [smem:[#allocation4 + $0x58]]
    %v1028 = vstv %s1027
    %v1029 = vmul.f32 %v678, %v1028
    %1031 = vrot.lane.b32.xlu0 %v1029, 48
    %v1032 = vpop.permute.xlu0 %1031
    %v1033 = vrot.slane %v1032, 2
    %v1034 = vsel %vm543, %v1032, %v1033
    %v1036 = vadd.f32 %v966, %v1034
    %s1037 = sld [smem:[#allocation4 + $0x59]]
    %v1038 = vstv %s1037
    %v1039 = vmul.f32 %v678, %v1038
    %1041 = vrot.lane.b32.xlu0 %v1039, 48
    %v1042 = vpop.permute.xlu0 %1041
    %v1043 = vrot.slane %v1042, 2
    %v1044 = vsel %vm543, %v1042, %v1043
    %v1046 = vadd.f32 %v976, %v1044
    %s1047 = sld [smem:[#allocation4 + $0x5a]]
    %v1048 = vstv %s1047
    %v1049 = vmul.f32 %v678, %v1048
    %1051 = vrot.lane.b32.xlu0 %v1049, 48
    %v1052 = vpop.permute.xlu0 %1051
    %v1053 = vrot.slane %v1052, 2
    %v1054 = vsel %vm543, %v1052, %v1053
    %v1056 = vadd.f32 %v986, %v1054
    %s1057 = sld [smem:[#allocation4 + $0x5b]]
    %v1058 = vstv %s1057
    %v1059 = vmul.f32 %v678, %v1058
    %1061 = vrot.lane.b32.xlu0 %v1059, 32
    %v1062 = vpop.permute.xlu0 %1061
    %v1063 = vrot.slane %v1062, 2
    %v1064 = vsel %vm614, %v1062, %v1063
    %v1066 = vadd.f32 %v996, %v1064
    %s1067 = sld [smem:[#allocation4 + $0x5c]]
    %v1068 = vstv %s1067
    %v1069 = vmul.f32 %v678, %v1068
    %1071 = vrot.lane.b32.xlu0 %v1069, 32
    %v1072 = vpop.permute.xlu0 %1071
    %v1073 = vrot.slane %v1072, 2
    %v1074 = vsel %vm614, %v1072, %v1073
    %v1076 = vadd.f32 %v1006, %v1074
    %s1077 = sld [smem:[#allocation4 + $0x5d]]
    %v1078 = vstv %s1077
    %v1079 = vmul.f32 %v678, %v1078
    %1081 = vrot.lane.b32.xlu0 %v1079, 32
    %v1082 = vpop.permute.xlu0 %1081
    %v1083 = vrot.slane %v1082, 2
    %v1084 = vsel %vm614, %v1082, %v1083
    %v1086 = vadd.f32 %v1016, %v1084
    %s1087 = sld [smem:[#allocation4 + $0x5e]]
    %v1088 = vstv %s1087
    %v1089 = vmul.f32 %v678, %v1088
    %1091 = vrot.lane.b32.xlu0 %v1089, 32
    %v1092 = vpop.permute.xlu0 %1091
    %v1093 = vrot.slane %v1092, 2
    %v1094 = vsel %vm614, %v1092, %v1093
    %v1096 = vadd.f32 %v1026, %v1094
    %s1097 = sld [smem:[#allocation4 + $0x5f]]
    %v1098 = vstv %s1097
    %v1099 = vmul.f32 %v678, %v1098
    %1101 = vrot.lane.b32.xlu0 %v1099, 32
    %v1102 = vpop.permute.xlu0 %1101
    %v1103 = vrot.slane %v1102, 2
    %v1104 = vsel %vm614, %v1102, %v1103
    %v1106 = vadd.f32 %v1036, %v1104
    %s1107 = sld [smem:[#allocation4 + $0x60]]
    %v1108 = vstv %s1107
    %v1109 = vmul.f32 %v678, %v1108
    %1111 = vrot.lane.b32.xlu0 %v1109, 32
    %v1112 = vpop.permute.xlu0 %1111
    %v1113 = vrot.slane %v1112, 2
    %v1114 = vsel %vm614, %v1112, %v1113
    %v1116 = vadd.f32 %v1046, %v1114
    %s1117 = sld [smem:[#allocation4 + $0x61]]
    %v1118 = vstv %s1117
    %v1119 = vmul.f32 %v678, %v1118
    %1121 = vrot.lane.b32.xlu0 %v1119, 32
    %v1122 = vpop.permute.xlu0 %1121
    %v1123 = vrot.slane %v1122, 2
    %v1124 = vsel %vm614, %v1122, %v1123
    %v1126 = vadd.f32 %v1056, %v1124
    %s1127 = sld [smem:[#allocation4 + $0x62]]
    %v1128 = vstv %s1127
    %v1129 = vsel %vm209, 1, 0
    %v1130 = vlaneseq
    %v1131 = vshrl.u32 %v1130, 7
    %v1132 = vsub.s32 0, %v1131
    %v1133 = vrot.slane %v1129, %v1132
    %v1134 = vlaneseq
    %v1135 = vshrl.u32 %v1134, 7
    %v1136 = vsub.s32 1, %v1135
    %v1137 = vrot.slane %v1129, %v1136
    %vm1138 = vcmp.eq.s32.totalorder %v1133, 1
    %vm1139 = vcmp.eq.s32.totalorder %v1137, 1
    %v1142 = vunpack.c.l.s4 1983009808
    %v1143 = vunpack.c.0.s8 %v1142
    %v1144 = vlaneseq
    %v1145 = vshrl.u32 %v1144, 7
    %v1146 = vsub.s32 %v1143, %v1145
    %v1147 = vrot.slane %v1066, %v1146
    %v1148 = vcombine.high %v1147, %v1147
    %v1151 = vsel %vm1138, %v1147, 0.0
    %v1152 = vsel %vm1139, %v1148, 0.0
    %v1153 = vadd.f32 %v1128, %v1151
    %v1154 = vadd.f32 %v1128, %v1152
    %v1155 = vsel %vm213, 1, 0
    %v1156 = vlaneseq
    %v1157 = vshrl.u32 %v1156, 7
    %v1158 = vsub.s32 0, %v1157
    %v1159 = vrot.slane %v1155, %v1158
    %v1160 = vlaneseq
    %v1161 = vshrl.u32 %v1160, 7
    %v1162 = vsub.s32 1, %v1161
    %v1163 = vrot.slane %v1155, %v1162
    %vm1164 = vcmp.eq.s32.totalorder %v1159, 1
    %vm1165 = vcmp.eq.s32.totalorder %v1163, 1
    %v1167 = vcombine.high %v1076, %v1076
    %v1169 = vunpack.c.l.s4 1983009808
    %v1170 = vunpack.c.0.s8 %v1169
    %v1171 = vlaneseq
    %v1172 = vshrl.u32 %v1171, 7
    %v1173 = vsub.s32 %v1170, %v1172
    %v1174 = vrot.slane %v1076, %v1173
    %v1176 = vunpack.c.l.s4 1983009808
    %v1177 = vunpack.c.0.s8 %v1176
    %v1178 = vlaneseq
    %v1179 = vshrl.u32 %v1178, 7
    %v1180 = vsub.s32 %v1177, %v1179
    %v1181 = vrot.slane %v1167, %v1180
    %v1182 = vcombine.high %v1174, %v1174
    %1183 = vrot.lane.b32.xlu0 %v1174, 127
    %v1184 = vpop.permute.xlu0 %1183
    %1185 = vrot.lane.b32.xlu0 %v1182, 127
    %v1186 = vpop.permute.xlu0 %1185
    %1187 = vrot.lane.b32.xlu0 %v1181, 127
    %v1188 = vpop.permute.xlu0 %1187
    %vm1189 = vcmask 1039360
    %v1190 = vsel %vm1189, %v1184, %v1186
    %v1191 = vsel %vm1189, %v1186, %v1188
    %v1194 = vsel %vm1164, %v1190, 0.0
    %v1195 = vsel %vm1165, %v1191, 0.0
    %v1196 = vadd.f32 %v1153, %v1194
    %v1197 = vadd.f32 %v1154, %v1195
    %v1198 = vsel %vm217, 1, 0
    %v1199 = vlaneseq
    %v1200 = vshrl.u32 %v1199, 7
    %v1201 = vsub.s32 0, %v1200
    %v1202 = vrot.slane %v1198, %v1201
    %v1203 = vlaneseq
    %v1204 = vshrl.u32 %v1203, 7
    %v1205 = vsub.s32 1, %v1204
    %v1206 = vrot.slane %v1198, %v1205
    %vm1207 = vcmp.eq.s32.totalorder %v1202, 1
    %vm1208 = vcmp.eq.s32.totalorder %v1206, 1
    %v1210 = vcombine.high %v1086, %v1086
    %v1212 = vunpack.c.l.s4 1983009808
    %v1213 = vunpack.c.0.s8 %v1212
    %v1214 = vlaneseq
    %v1215 = vshrl.u32 %v1214, 7
    %v1216 = vsub.s32 %v1213, %v1215
    %v1217 = vrot.slane %v1086, %v1216
    %v1219 = vunpack.c.l.s4 1983009808
    %v1220 = vunpack.c.0.s8 %v1219
    %v1221 = vlaneseq
    %v1222 = vshrl.u32 %v1221, 7
    %v1223 = vsub.s32 %v1220, %v1222
    %v1224 = vrot.slane %v1210, %v1223
    %v1225 = vcombine.high %v1217, %v1217
    %1226 = vrot.lane.b32.xlu0 %v1217, 126
    %v1227 = vpop.permute.xlu0 %1226
    %1228 = vrot.lane.b32.xlu0 %v1225, 126
    %v1229 = vpop.permute.xlu0 %1228
    %1230 = vrot.lane.b32.xlu0 %v1224, 126
    %v1231 = vpop.permute.xlu0 %1230
    %vm1232 = vcmask 1031168
    %v1233 = vsel %vm1232, %v1227, %v1229
    %v1234 = vsel %vm1232, %v1229, %v1231
    %v1237 = vsel %vm1207, %v1233, 0.0
    %v1238 = vsel %vm1208, %v1234, 0.0
    %v1239 = vadd.f32 %v1196, %v1237
    %v1240 = vadd.f32 %v1197, %v1238
    %v1242 = vcombine.high %v1096, %v1096
    %v1244 = vunpack.c.l.s4 1983009808
    %v1245 = vunpack.c.0.s8 %v1244
    %v1246 = vlaneseq
    %v1247 = vshrl.u32 %v1246, 7
    %v1248 = vsub.s32 %v1245, %v1247
    %v1249 = vrot.slane %v1096, %v1248
    %v1251 = vunpack.c.l.s4 1983009808
    %v1252 = vunpack.c.0.s8 %v1251
    %v1253 = vlaneseq
    %v1254 = vshrl.u32 %v1253, 7
    %v1255 = vsub.s32 %v1252, %v1254
    %v1256 = vrot.slane %v1242, %v1255
    %v1257 = vcombine.high %v1249, %v1249
    %1258 = vrot.lane.b32.xlu0 %v1249, 125
    %v1259 = vpop.permute.xlu0 %1258
    %1260 = vrot.lane.b32.xlu0 %v1257, 125
    %v1261 = vpop.permute.xlu0 %1260
    %1262 = vrot.lane.b32.xlu0 %v1256, 125
    %v1263 = vpop.permute.xlu0 %1262
    %vm1264 = vcmask 1022976
    %v1265 = vsel %vm1264, %v1259, %v1261
    %v1266 = vsel %vm1264, %v1261, %v1263
    %v1269 = vadd.f32 %v1239, %v1265
    %v1270 = vadd.f32 %v1240, %v1266
    %v1271 = vsel %vm221, 1, 0
    %v1272 = vlaneseq
    %v1273 = vshrl.u32 %v1272, 7
    %v1274 = vsub.s32 0, %v1273
    %v1275 = vrot.slane %v1271, %v1274
    %v1276 = vlaneseq
    %v1277 = vshrl.u32 %v1276, 7
    %v1278 = vsub.s32 1, %v1277
    %v1279 = vrot.slane %v1271, %v1278
    %vm1280 = vcmp.eq.s32.totalorder %v1275, 1
    %vm1281 = vcmp.eq.s32.totalorder %v1279, 1
    %v1283 = vcombine.high %v1106, %v1106
    %v1285 = vunpack.c.l.s4 1983009808
    %v1286 = vunpack.c.0.s8 %v1285
    %v1287 = vlaneseq
    %v1288 = vshrl.u32 %v1287, 7
    %v1289 = vsub.s32 %v1286, %v1288
    %v1290 = vrot.slane %v1106, %v1289
    %v1292 = vunpack.c.l.s4 1983009808
    %v1293 = vunpack.c.0.s8 %v1292
    %v1294 = vlaneseq
    %v1295 = vshrl.u32 %v1294, 7
    %v1296 = vsub.s32 %v1293, %v1295
    %v1297 = vrot.slane %v1283, %v1296
    %v1298 = vcombine.high %v1290, %v1290
    %1299 = vrot.lane.b32.xlu0 %v1290, 124
    %v1300 = vpop.permute.xlu0 %1299
    %1301 = vrot.lane.b32.xlu0 %v1298, 124
    %v1302 = vpop.permute.xlu0 %1301
    %1303 = vrot.lane.b32.xlu0 %v1297, 124
    %v1304 = vpop.permute.xlu0 %1303
    %vm1305 = vcmask 1014784
    %v1306 = vsel %vm1305, %v1300, %v1302
    %v1307 = vsel %vm1305, %v1302, %v1304
    %v1310 = vsel %vm1280, %v1306, 0.0
    %v1311 = vsel %vm1281, %v1307, 0.0
    %v1312 = vadd.f32 %v1269, %v1310
    %v1313 = vadd.f32 %v1270, %v1311
    %v1314 = vsel %vm225, 1, 0
    %v1315 = vlaneseq
    %v1316 = vshrl.u32 %v1315, 7
    %v1317 = vsub.s32 0, %v1316
    %v1318 = vrot.slane %v1314, %v1317
    %v1319 = vlaneseq
    %v1320 = vshrl.u32 %v1319, 7
    %v1321 = vsub.s32 1, %v1320
    %v1322 = vrot.slane %v1314, %v1321
    %vm1323 = vcmp.eq.s32.totalorder %v1318, 1
    %vm1324 = vcmp.eq.s32.totalorder %v1322, 1
    %v1326 = vcombine.high %v1116, %v1116
    %v1328 = vunpack.c.l.s4 1983009808
    %v1329 = vunpack.c.0.s8 %v1328
    %v1330 = vlaneseq
    %v1331 = vshrl.u32 %v1330, 7
    %v1332 = vsub.s32 %v1329, %v1331
    %v1333 = vrot.slane %v1116, %v1332
    %v1335 = vunpack.c.l.s4 1983009808
    %v1336 = vunpack.c.0.s8 %v1335
    %v1337 = vlaneseq
    %v1338 = vshrl.u32 %v1337, 7
    %v1339 = vsub.s32 %v1336, %v1338
    %v1340 = vrot.slane %v1326, %v1339
    %v1341 = vcombine.high %v1333, %v1333
    %1342 = vrot.lane.b32.xlu0 %v1333, 123
    %v1343 = vpop.permute.xlu0 %1342
    %1344 = vrot.lane.b32.xlu0 %v1341, 123
    %v1345 = vpop.permute.xlu0 %1344
    %1346 = vrot.lane.b32.xlu0 %v1340, 123
    %v1347 = vpop.permute.xlu0 %1346
    %vm1348 = vcmask 1006592
    %v1349 = vsel %vm1348, %v1343, %v1345
    %v1350 = vsel %vm1348, %v1345, %v1347
    %v1353 = vsel %vm1323, %v1349, 0.0
    %v1354 = vsel %vm1324, %v1350, 0.0
    %v1355 = vadd.f32 %v1312, %v1353
    %v1356 = vadd.f32 %v1313, %v1354
    %v1357 = vsel %vm229, 1, 0
    %v1358 = vlaneseq
    %v1359 = vshrl.u32 %v1358, 7
    %v1360 = vsub.s32 0, %v1359
    %v1361 = vrot.slane %v1357, %v1360
    %v1362 = vlaneseq
    %v1363 = vshrl.u32 %v1362, 7
    %v1364 = vsub.s32 1, %v1363
    %v1365 = vrot.slane %v1357, %v1364
    %vm1366 = vcmp.eq.s32.totalorder %v1361, 1
    %vm1367 = vcmp.eq.s32.totalorder %v1365, 1
    %v1369 = vcombine.high %v1126, %v1126
    %v1371 = vunpack.c.l.s4 1983009808
    %v1372 = vunpack.c.0.s8 %v1371
    %v1373 = vlaneseq
    %v1374 = vshrl.u32 %v1373, 7
    %v1375 = vsub.s32 %v1372, %v1374
    %v1376 = vrot.slane %v1126, %v1375
    %v1378 = vunpack.c.l.s4 1983009808
    %v1379 = vunpack.c.0.s8 %v1378
    %v1380 = vlaneseq
    %v1381 = vshrl.u32 %v1380, 7
    %v1382 = vsub.s32 %v1379, %v1381
    %v1383 = vrot.slane %v1369, %v1382
    %v1384 = vcombine.high %v1376, %v1376
    %1385 = vrot.lane.b32.xlu0 %v1376, 122
    %v1386 = vpop.permute.xlu0 %1385
    %1387 = vrot.lane.b32.xlu0 %v1384, 122
    %v1388 = vpop.permute.xlu0 %1387
    %1389 = vrot.lane.b32.xlu0 %v1383, 122
    %v1390 = vpop.permute.xlu0 %1389
    %vm1391 = vcmask 998400
    %v1392 = vsel %vm1391, %v1386, %v1388
    %v1393 = vsel %vm1391, %v1388, %v1390
    %v1396 = vsel %vm1366, %v1392, 0.0
    %v1397 = vsel %vm1367, %v1393, 0.0
    %v1398 = vadd.f32 %v1355, %v1396
    %v1399 = vadd.f32 %v1356, %v1397
    %v1400 = vxor.u32 %v1398, 2147483648
    %v1401 = vxor.u32 %v1399, 2147483648
    %v1402 = vmul.f32 %v1400, 1.442695
    %v1403 = vpow.pop %v1402
    %v1404 = vmul.f32 %v1401, 1.442695
    %v1405 = vpow.pop %v1404
    %v1406 = vadd.f32 %v1403, 1.0
    %v1407 = vadd.f32 %v1405, 1.0
    %v1408 = vrcp.pop %v1406
    %v1409 = vmul.f32 1.0, %v1408
    %v1410 = vrcp.pop %v1407
    %v1411 = vmul.f32 1.0, %v1410
    %v1414 = vcombine.low %v1409, %v1411
    %v1416 = vunpack.c.l.s4 1966171168
    %v1417 = vunpack.c.0.s8 %v1416
    %v1418 = vlaneseq
    %v1419 = vshrl.u32 %v1418, 7
    %v1420 = vsub.s32 %v1417, %v1419
    %v1421 = vrot.slane %v1414, %v1420
    %v1422 = vcombine.high %v1421, %v1421
    %v1424 = vunpack.c.l.s4 1966171168
    %v1425 = vunpack.c.0.s8 %v1424
    %v1426 = vlaneseq
    %v1427 = vshrl.u32 %v1426, 7
    %v1428 = vsub.s32 %v1425, %v1427
    %v1429 = vrot.slane %v1421, %v1428
    %v1431 = vunpack.c.l.s4 1966171168
    %v1432 = vunpack.c.0.s8 %v1431
    %v1433 = vlaneseq
    %v1434 = vshrl.u32 %v1433, 7
    %v1435 = vsub.s32 %v1432, %v1434
    %v1436 = vrot.slane %v1422, %v1435
    %v1437 = vlaneseq
    %v1438 = vshrl.u32 %v1437, 7
    %v1439 = vsub.s32 0, %v1438
    %v1440 = vrot.slane %v1429, %v1439
    %v1441 = vlaneseq
    %v1442 = vshrl.u32 %v1441, 7
    %v1443 = vsub.s32 1, %v1442
    %v1444 = vrot.slane %v1429, %v1443
    %v1445 = vlaneseq
    %v1446 = vshrl.u32 %v1445, 7
    %v1447 = vsub.s32 0, %v1446
    %v1448 = vrot.slane %v1436, %v1447
    %v1449 = vlaneseq
    %v1450 = vshrl.u32 %v1449, 7
    %v1451 = vsub.s32 1, %v1450
    %v1452 = vrot.slane %v1436, %v1451
    %v1453 = vcombine.low %v1440, %v1444
    %v1454 = vcombine.low %v1448, %v1452
    %v1457 = vmul.f32 %v52, %v1453
    %v1458 = vmul.f32 %v53, %v1454
    %1459 = vst [vmem:[#allocation11] sm:$0xff] %v1457
    %1460 = vst [vmem:[#allocation11 + $0x8] sm:$0xff] %v1458
    // Predicated region
    $region26: #{tpu_custom_call.1} parent=1 // pred_check
      _
    $region27: #{tpu_custom_call.1} parent=1 // pred_check_branch
      %1462 = sbr.rel (0) target = $region29
    $region28: #{tpu_custom_call.1} parent=1 // pred_region
      %s1464 = ssub.s32 256, 256
      %1465 = vsyncadd [#allocation6], %s1464
      %s1466 = sshll.u32 [#allocation11], 4
      %s1467 = int_to_ptr.vmem [resolvable:$true] %s1466
      %1472 = dma.vmem_to_hbm [thread:$0]  %s1467, 256, %s3, [#allocation6], 128, 128, 8
    $region29: #{tpu_custom_call.1} parent=1 // pred_fallthru
      _
    // Predicated region
    $region30: #{tpu_custom_call.1} parent=1 // pred_check
      _
    $region31: #{tpu_custom_call.1} parent=1 // pred_check_branch
      %1474 = sbr.rel (0) target = $region33
    $region32: #{tpu_custom_call.1} parent=1 // pred_region
      %1475 = dma.done [#allocation6], 256
    $region33: #{tpu_custom_call.1} parent=1 // pred_fallthru
      _
    %1476 = vsyncpa [#allocation5], 1
    %1477 = vsyncpa [#allocation10], 1
    %1478 = vsyncpa [#allocation6], 1
    %1479 = vsyncpa [#allocation7], 1

</llo_original>
